<compile_context>
chip_gen: v5e
topology: v5e:2x2
jax: 0.10.0
libtpu: 0.0.40
codegen_flags: <defaults>
</compile_context>

<pallas_src>
import jax
import jax.numpy as jnp
from jax.experimental import pallas as pl
from jax.experimental.pallas import tpu as pltpu

HALO = 16  # per-side recompute halo, >= 1+3+9; multiple of 8 keeps slices sublane-aligned


def _round_up(v, m):
    return (v + m - 1) // m * m


def make_kernel(tT, W, Cp, n_blocks):
    dils = [3 ** i for i in range(n_blocks)]
    rT = HALO + tT  # window-relative row of the global right edge (for the last tile)

    def kernel(x_hbm, w_ref, b_ref, out_ref, xwin, hm, hp, cat, sem):
        n = pl.program_id(0)
        t = pl.program_id(1)

        # Fetch this tile's overlapping (W, Cp) window: tT output rows + HALO each side.
        cp_in = pltpu.make_async_copy(x_hbm.at[n, pl.ds(t * tT, W), :], xwin, sem)
        cp_in.start()
        cp_in.wait()

        is_first = t == 0
        is_last = t == pl.num_programs(1) - 1

        x = xwin[...]                                          # (W, Cp) f32, VMEM-resident
        for i, d in enumerate(dils):                           # statically unrolled
            h = jnp.maximum(x, 0.2 * x)                        # LeakyReLU(0.2), f32

            # Shifted taps via XLU rolls; the d boundary rows at each end are then
            # overwritten with reflection values iff this tile owns that global edge
            # (otherwise the blend re-writes the identical rolled values -> no-op).
            hm[...] = pltpu.roll(h, d, axis=0)                 # hm[r] = h[r - d]
            hp[...] = pltpu.roll(h, W - d, axis=0)             # hp[r] = h[r + d]

            left_refl = jnp.concatenate(
                [h[HALO + d - j:HALO + d - j + 1, :] for j in range(d)], axis=0)
            left_int = h[HALO - d:HALO, :]
            hm[HALO:HALO + d, :] = jnp.where(is_first, left_refl, left_int)

            right_refl = jnp.concatenate(
                [h[rT - 2 - j:rT - 1 - j, :] for j in range(d)], axis=0)
            right_int = h[rT:rT + d, :]
            hp[rT - d:rT, :] = jnp.where(is_last, right_refl, right_int)

            # Dilated k=3 conv as one lane-dense (W, 3Cp) @ (3Cp, Cp) MXU matmul.
            cat[:, 0:Cp] = hm[...].astype(jnp.bfloat16)
            cat[:, Cp:2 * Cp] = h.astype(jnp.bfloat16)
            cat[:, 2 * Cp:3 * Cp] = hp[...].astype(jnp.bfloat16)
            y = jnp.dot(cat[...], w_ref[i, 0:3 * Cp, :],
                        preferred_element_type=jnp.float32) + b_ref[i, 0:1, :]

            # Fused (1x1 conv of lrelu(y)) + (1x1 shortcut of x): one K=2*Cp matmul.
            y = jnp.maximum(y, 0.2 * y)
            cat[:, 0:Cp] = y.astype(jnp.bfloat16)
            cat[:, Cp:2 * Cp] = x.astype(jnp.bfloat16)
            x = jnp.dot(cat[:, 0:2 * Cp], w_ref[i, 3 * Cp:5 * Cp, :],
                        preferred_element_type=jnp.float32) + b_ref[i, 1:2, :]

        out_ref[0] = x[HALO:HALO + tT, :].astype(out_ref.dtype)

    return kernel


def pack_params(params, Cp):
    """PyTorch Conv1d (Cout, Cin, K) -> stacked kernel weights, channel-padded to Cp.

    w_all: (B, 5*Cp, Cp) bf16, rows = [tap0; tap1; tap2; w_1x1; w_shortcut] (Cin-major)
    b_all: (B, 2, Cp)    f32,  rows = [b_conv3; b_1x1 + b_shortcut]
    """
    ws, bs = [], []
    for p in params:
        C = p["b3"].shape[0]

        def pad_mat(m):                       # (Cin, Cout) -> (Cp, Cp), zero-padded
            return jnp.pad(m, ((0, Cp - C), (0, Cp - C)))

        def pad_bias(b):                      # (C,) -> (1, Cp)
            return jnp.pad(b, (0, Cp - C))[None, :]

        taps = [pad_mat(p["w3_pt"][:, :, k].T) for k in range(3)]
        w1 = pad_mat(p["w1_pt"][:, :, 0].T)
        wsc = pad_mat(p["ws_pt"][:, :, 0].T)
        ws.append(jnp.concatenate(taps + [w1, wsc], axis=0))             # (5Cp, Cp)
        bs.append(jnp.concatenate([pad_bias(p["b3"]),
                                   pad_bias(p["b1"]) + pad_bias(p["bs"])], axis=0))
    return jnp.stack(ws).astype(jnp.bfloat16), jnp.stack(bs).astype(jnp.float32)


def res_stack_forward(x_nct, params, *, time_tile=1024):
    """x_nct: (N, C, T) float32; params: list of 3 per-block dicts (PyTorch layout)."""
    N, C, T = x_nct.shape
    n_blocks = len(params)
    d_max = 3 ** (n_blocks - 1)
    assert T > d_max, "ReflectionPad1d requires T > largest dilation (9)"

    # Time tiling: tiles shorter than 16 could let the global reflection region spill
    # into a neighbor tile, so fall back to a single tile in that case.
    if time_tile >= T or T % time_tile != 0 or time_tile % 8 != 0 or time_tile < 16:
        tT, nt = T, 1
    else:
        tT, nt = time_tile, T // time_tile
    W = tT + 2 * HALO

    Cp = _round_up(max(C, 128), 128)                       # lane-dense channel dim
    w_all, b_all = pack_params(params, Cp)

    # NCT -> NTC; zero-pad channels to lane width and time by HALO on each side.
    x = jnp.transpose(x_nct, (0, 2, 1))
    x = jnp.pad(x, ((0, 0), (HALO, HALO), (0, Cp - C)))    # (N, T + 2*HALO, Cp)

    flops = 2 * N * n_blocks * T * (5 * Cp) * Cp           # 3 taps + fused 1x1+shortcut
    bytes_accessed = int(x.size * 4 + N * T * Cp * 4 + w_all.size * 2 + b_all.size * 4)

    vmem_est = (3 * W * Cp * 4                             # xwin, hm, hp
                + W * 3 * Cp * 2                           # cat (bf16 matmul operand)
                + 2 * tT * Cp * 4                          # double-buffered output block
                + 2 * (w_all.size * 2 + b_all.size * 4)    # weight/bias blocks
                + 8 * W * Cp * 4)                          # f32 value intermediates
    vmem_limit = int(min(max(vmem_est * 3 // 2, 16 * 1024 * 1024), 64 * 1024 * 1024))

    out = pl.pallas_call(
        make_kernel(tT, W, Cp, n_blocks),
        out_shape=jax.ShapeDtypeStruct((N, T, Cp), jnp.float32),
        grid=(N, nt),
        in_specs=[
            pl.BlockSpec(memory_space=pl.ANY),                              # x (manual DMA)
            pl.BlockSpec((n_blocks, 5 * Cp, Cp), lambda n, t: (0, 0, 0)),   # stacked weights
            pl.BlockSpec((n_blocks, 2, Cp), lambda n, t: (0, 0, 0)),        # stacked biases
        ],
        out_specs=pl.BlockSpec((1, tT, Cp), lambda n, t: (n, t, 0)),
        scratch_shapes=[
            pltpu.VMEM((W, Cp), jnp.float32),        # xwin (input window)
            pltpu.VMEM((W, Cp), jnp.float32),        # hm   (tap -d)
            pltpu.VMEM((W, Cp), jnp.float32),        # hp   (tap +d)
            pltpu.VMEM((W, 3 * Cp), jnp.bfloat16),   # cat  (lane-dense MXU operand)
            pltpu.SemaphoreType.DMA,
        ],
        compiler_params=pltpu.CompilerParams(
            dimension_semantics=("parallel", "parallel"),
            vmem_limit_bytes=vmem_limit),
        cost_estimate=pl.CostEstimate(flops=flops, transcendentals=0,
                                      bytes_accessed=bytes_accessed),
    )(x, w_all, b_all)

    return jnp.transpose(out[:, :, :C], (0, 2, 1))         # back to (N, C, T)


def init_params(key, channel):
    """Deterministic synthetic weights in PyTorch Conv1d layout (Cout, Cin, K)."""
    params = []
    for i in range(3):
        keys = jax.random.split(jax.random.fold_in(key, i), 6)
        params.append(dict(
            w3_pt=0.1 * jax.random.normal(keys[0], (channel, channel, 3), jnp.float32),
            b3=0.1 * jax.random.normal(keys[1], (channel,), jnp.float32),
            w1_pt=0.1 * jax.random.normal(keys[2], (channel, channel, 1), jnp.float32),
            b1=0.1 * jax.random.normal(keys[3], (channel,), jnp.float32),
            ws_pt=0.1 * jax.random.normal(keys[4], (channel, channel, 1), jnp.float32),
            bs=0.1 * jax.random.normal(keys[5], (channel,), jnp.float32),
        ))
    return params


def res_stack_reference(x_nct, params):
    """Pure-JAX f32 reference using lax convolutions (NCT layout, like PyTorch)."""
    dn = ("NCH", "OIH", "NCH")
    x = x_nct
    for i, p in enumerate(params):
        d = 3 ** i
        h = jnp.where(x > 0, x, 0.2 * x)
        h = jnp.pad(h, ((0, 0), (0, 0), (d, d)), mode="reflect")
        h = jax.lax.conv_general_dilated(
            h, p["w3_pt"], window_strides=(1,), padding="VALID",
            rhs_dilation=(d,), dimension_numbers=dn) + p["b3"][None, :, None]
        h = jnp.where(h > 0, h, 0.2 * h)
        h = jax.lax.conv_general_dilated(
            h, p["w1_pt"], window_strides=(1,), padding="VALID",
            dimension_numbers=dn) + p["b1"][None, :, None]
        sc = jax.lax.conv_general_dilated(
            x, p["ws_pt"], window_strides=(1,), padding="VALID",
            dimension_numbers=dn) + p["bs"][None, :, None]
        x = sc + h
    return x


if __name__ == "__main__":
    N, C, T = 2, 4, 48          # batch, channels, time (T > 9 for dilation-9 reflect pad)
    key = jax.random.PRNGKey(0)
    kx, kp = jax.random.split(key)
    x = jax.random.normal(kx, (N, C, T), jnp.float32)
    params = init_params(kp, C)

    ref = jax.block_until_ready(res_stack_reference(x, params))
    # Multi-tile path (3 time tiles of 16: left-edge / interior / right-edge tiles)
    # and the single-tile fallback.
    out_tiled = jax.block_until_ready(res_stack_forward(x, params, time_tile=16))
    out_single = jax.block_until_ready(res_stack_forward(x, params, time_tile=T))

    for out in (out_tiled, out_single):
        assert out.shape == (N, C, T)
        err = float(jnp.max(jnp.abs(out - ref)))
        # bf16 MXU operands vs. an all-f32 reference -> loose-ish deterministic tolerance.
        assert err < 3e-2, f"mismatch vs reference: {err}"
    print("KERNEL_OK")
</pallas_src>

<mosaic_0001>
module attributes {stable_mosaic.version = 11 : i64} {
  func.func @kernel(%arg0: i32, %arg1: i32, %arg2: memref<2x80x128xf32, #tpu.memory_space<any>>, %arg3: memref<3x640x128xbf16, #tpu.memory_space<vmem>>, %arg4: memref<3x2x128xf32, #tpu.memory_space<vmem>>, %arg5: memref<1x16x128xf32, #tpu.memory_space<vmem>>, %arg6: memref<48x128xf32, #tpu.memory_space<vmem>>, %arg7: memref<48x128xf32, #tpu.memory_space<vmem>>, %arg8: memref<48x128xf32, #tpu.memory_space<vmem>>, %arg9: memref<48x384xbf16, #tpu.memory_space<vmem>>, %arg10: memref<!tpu.dma_semaphore, #tpu.memory_space<semaphore_mem>>) attributes {dimension_semantics = [#tpu.dimension_semantics<parallel>, #tpu.dimension_semantics<parallel>], iteration_bounds = array<i64: 2, 3>, scalar_prefetch = 0 : i64, scratch_operands = 5 : i64, tpu.core_type = #tpu.core_type<tc>, window_params = [{}, {pipeline_mode = #tpu.pipeline_mode<synchronous>, transform_indices = @transform_1, window_bounds = array<i64: 3, 640, 128>}, {pipeline_mode = #tpu.pipeline_mode<synchronous>, transform_indices = @transform_2, window_bounds = array<i64: 3, 2, 128>}, {transform_indices = @transform_3, window_bounds = array<i64: 1, 16, 128>}]} {
    %c16_i32 = arith.constant 16 : i32
    %0 = arith.muli %arg1, %c16_i32 : i32
    %c0_i32 = arith.constant 0 : i32
    %1 = tpu.memref_slice %arg2[%arg0, %0, %c0_i32] : memref<2x80x128xf32, #tpu.memory_space<any>> -> memref<1x48x128xf32, #tpu.memory_space<any>>
    %2 = tpu.memref_squeeze %1 : memref<1x48x128xf32, #tpu.memory_space<any>> -> memref<48x128xf32, #tpu.memory_space<any>>
    tpu.enqueue_dma source(%2 : memref<48x128xf32, #tpu.memory_space<any>>) target(%arg6 : memref<48x128xf32, #tpu.memory_space<vmem>>) target_semaphore(%arg10 : memref<!tpu.dma_semaphore, #tpu.memory_space<semaphore_mem>>)
    %c0_i32_0 = arith.constant 0 : i32
    %3 = tpu.memref_slice %arg2[%arg0, %0, %c0_i32_0] : memref<2x80x128xf32, #tpu.memory_space<any>> -> memref<1x48x128xf32, #tpu.memory_space<any>>
    %4 = tpu.memref_squeeze %3 : memref<1x48x128xf32, #tpu.memory_space<any>> -> memref<48x128xf32, #tpu.memory_space<any>>
    tpu.wait_dma2 semaphore(%arg10 : memref<!tpu.dma_semaphore, #tpu.memory_space<semaphore_mem>>) src(%4 : memref<48x128xf32, #tpu.memory_space<any>>) dst(%arg6 : memref<48x128xf32, #tpu.memory_space<vmem>>)
    %c0_i32_1 = arith.constant 0 : i32
    %5 = arith.cmpi eq, %arg1, %c0_i32_1 : i32
    %c2_i32 = arith.constant 2 : i32
    %6 = arith.cmpi eq, %arg1, %c2_i32 : i32
    %c0 = arith.constant 0 : index
    %c0_2 = arith.constant 0 : index
    %7 = vector.load %arg6[%c0, %c0_2] : memref<48x128xf32, #tpu.memory_space<vmem>>, vector<48x128xf32>
    %cst = arith.constant 2.000000e-01 : f32
    %8 = vector.broadcast %cst : f32 to vector<48x128xf32>
    %9 = arith.mulf %8, %7 : vector<48x128xf32>
    %10 = arith.maximumf %7, %9 : vector<48x128xf32>
    %c1_i32 = arith.constant 1 : i32
    %11 = tpu.dynamic_rotate %10 by %c1_i32 dim 0 : vector<48x128xf32>, i32 -> vector<48x128xf32>
    %c0_3 = arith.constant 0 : index
    %c0_4 = arith.constant 0 : index
    %12 = vector.load %arg7[%c0_3, %c0_4] : memref<48x128xf32, #tpu.memory_space<vmem>>, vector<48x128xf32>
    tpu.vector_store %arg7[%c0_3, %c0_4], %11 {strides = array<i32>} : memref<48x128xf32, #tpu.memory_space<vmem>>, vector<48x128xf32>,
    %c47_i32 = arith.constant 47 : i32
    %13 = tpu.dynamic_rotate %10 by %c47_i32 dim 0 : vector<48x128xf32>, i32 -> vector<48x128xf32>
    %c0_5 = arith.constant 0 : index
    %c0_6 = arith.constant 0 : index
    %14 = vector.load %arg8[%c0_5, %c0_6] : memref<48x128xf32, #tpu.memory_space<vmem>>, vector<48x128xf32>
    tpu.vector_store %arg8[%c0_5, %c0_6], %13 {strides = array<i32>} : memref<48x128xf32, #tpu.memory_space<vmem>>, vector<48x128xf32>,
    %15 = vector.extract_strided_slice %10 {offsets = [17, 0], sizes = [1, 128], strides = [1, 1]} : vector<48x128xf32> to vector<1x128xf32>
    %16 = vector.extract_strided_slice %10 {offsets = [15, 0], sizes = [1, 128], strides = [1, 1]} : vector<48x128xf32> to vector<1x128xf32>
    %17 = arith.select %5, %15, %16 : vector<1x128xf32>
    %c16 = arith.constant 16 : index
    %c0_7 = arith.constant 0 : index
    %18 = vector.load %arg7[%c16, %c0_7] : memref<48x128xf32, #tpu.memory_space<vmem>>, vector<1x128xf32>
    tpu.vector_store %arg7[%c16, %c0_7], %17 {strides = array<i32>} : memref<48x128xf32, #tpu.memory_space<vmem>>, vector<1x128xf32>,
    %19 = vector.extract_strided_slice %10 {offsets = [30, 0], sizes = [1, 128], strides = [1, 1]} : vector<48x128xf32> to vector<1x128xf32>
    %20 = vector.extract_strided_slice %10 {offsets = [32, 0], sizes = [1, 128], strides = [1, 1]} : vector<48x128xf32> to vector<1x128xf32>
    %21 = arith.select %6, %19, %20 : vector<1x128xf32>
    %c31 = arith.constant 31 : index
    %c0_8 = arith.constant 0 : index
    %22 = vector.load %arg8[%c31, %c0_8] : memref<48x128xf32, #tpu.memory_space<vmem>>, vector<1x128xf32>
    tpu.vector_store %arg8[%c31, %c0_8], %21 {strides = array<i32>} : memref<48x128xf32, #tpu.memory_space<vmem>>, vector<1x128xf32>,
    %c0_9 = arith.constant 0 : index
    %c0_10 = arith.constant 0 : index
    %23 = vector.load %arg7[%c0_9, %c0_10] : memref<48x128xf32, #tpu.memory_space<vmem>>, vector<48x128xf32>
    %24 = arith.truncf %23 : vector<48x128xf32> to vector<48x128xbf16>
    %c0_11 = arith.constant 0 : index
    %c0_12 = arith.constant 0 : index
    %25 = vector.load %arg9[%c0_11, %c0_12] : memref<48x384xbf16, #tpu.memory_space<vmem>>, vector<48x128xbf16>
    tpu.vector_store %arg9[%c0_11, %c0_12], %24 {strides = array<i32>} : memref<48x384xbf16, #tpu.memory_space<vmem>>, vector<48x128xbf16>,
    %26 = arith.truncf %10 : vector<48x128xf32> to vector<48x128xbf16>
    %c0_13 = arith.constant 0 : index
    %c128 = arith.constant 128 : index
    %27 = vector.load %arg9[%c0_13, %c128] : memref<48x384xbf16, #tpu.memory_space<vmem>>, vector<48x128xbf16>
    tpu.vector_store %arg9[%c0_13, %c128], %26 {strides = array<i32>} : memref<48x384xbf16, #tpu.memory_space<vmem>>, vector<48x128xbf16>,
    %c0_14 = arith.constant 0 : index
    %c0_15 = arith.constant 0 : index
    %28 = vector.load %arg8[%c0_14, %c0_15] : memref<48x128xf32, #tpu.memory_space<vmem>>, vector<48x128xf32>
    %29 = arith.truncf %28 : vector<48x128xf32> to vector<48x128xbf16>
    %c0_16 = arith.constant 0 : index
    %c256 = arith.constant 256 : index
    %30 = vector.load %arg9[%c0_16, %c256] : memref<48x384xbf16, #tpu.memory_space<vmem>>, vector<48x128xbf16>
    tpu.vector_store %arg9[%c0_16, %c256], %29 {strides = array<i32>} : memref<48x384xbf16, #tpu.memory_space<vmem>>, vector<48x128xbf16>,
    %c0_17 = arith.constant 0 : index
    %c0_18 = arith.constant 0 : index
    %31 = vector.load %arg9[%c0_17, %c0_18] : memref<48x384xbf16, #tpu.memory_space<vmem>>, vector<48x384xbf16>
    %c0_19 = arith.constant 0 : index
    %c0_20 = arith.constant 0 : index
    %c0_21 = arith.constant 0 : index
    %32 = vector.load %arg3[%c0_19, %c0_20, %c0_21] : memref<3x640x128xbf16, #tpu.memory_space<vmem>>, vector<1x384x128xbf16>
    %33 = vector.shape_cast %32 : vector<1x384x128xbf16> to vector<384x128xbf16>
    %cst_22 = arith.constant dense<0.000000e+00> : vector<48x128xf32>
    %34 = tpu.matmul %31, %33, %cst_22 {dimension_numbers = #tpu.dot_dimension_numbers<[1], [0], [0], [1], [0, 0, 1, 1], [], []>} : vector<48x384xbf16>, vector<384x128xbf16>, vector<48x128xf32> -> vector<48x128xf32>
    %c0_23 = arith.constant 0 : index
    %c0_24 = arith.constant 0 : index
    %c0_25 = arith.constant 0 : index
    %35 = vector.load %arg4[%c0_23, %c0_24, %c0_25] : memref<3x2x128xf32, #tpu.memory_space<vmem>>, vector<1x1x128xf32>
    %36 = vector.shape_cast %35 : vector<1x1x128xf32> to vector<1x128xf32>
    %37 = vector.broadcast %36 : vector<1x128xf32> to vector<48x128xf32>
    %38 = arith.addf %34, %37 : vector<48x128xf32>
    %cst_26 = arith.constant 2.000000e-01 : f32
    %39 = vector.broadcast %cst_26 : f32 to vector<48x128xf32>
    %40 = arith.mulf %39, %38 : vector<48x128xf32>
    %41 = arith.maximumf %38, %40 : vector<48x128xf32>
    %42 = arith.truncf %41 : vector<48x128xf32> to vector<48x128xbf16>
    %c0_27 = arith.constant 0 : index
    %c0_28 = arith.constant 0 : index
    %43 = vector.load %arg9[%c0_27, %c0_28] : memref<48x384xbf16, #tpu.memory_space<vmem>>, vector<48x128xbf16>
    tpu.vector_store %arg9[%c0_27, %c0_28], %42 {strides = array<i32>} : memref<48x384xbf16, #tpu.memory_space<vmem>>, vector<48x128xbf16>,
    %44 = arith.truncf %7 : vector<48x128xf32> to vector<48x128xbf16>
    %c0_29 = arith.constant 0 : index
    %c128_30 = arith.constant 128 : index
    %45 = vector.load %arg9[%c0_29, %c128_30] : memref<48x384xbf16, #tpu.memory_space<vmem>>, vector<48x128xbf16>
    tpu.vector_store %arg9[%c0_29, %c128_30], %44 {strides = array<i32>} : memref<48x384xbf16, #tpu.memory_space<vmem>>, vector<48x128xbf16>,
    %c0_31 = arith.constant 0 : index
    %c0_32 = arith.constant 0 : index
    %46 = vector.load %arg9[%c0_31, %c0_32] : memref<48x384xbf16, #tpu.memory_space<vmem>>, vector<48x256xbf16>
    %c0_33 = arith.constant 0 : index
    %c384 = arith.constant 384 : index
    %c0_34 = arith.constant 0 : index
    %47 = vector.load %arg3[%c0_33, %c384, %c0_34] : memref<3x640x128xbf16, #tpu.memory_space<vmem>>, vector<1x256x128xbf16>
    %48 = vector.shape_cast %47 : vector<1x256x128xbf16> to vector<256x128xbf16>
    %cst_35 = arith.constant dense<0.000000e+00> : vector<48x128xf32>
    %49 = tpu.matmul %46, %48, %cst_35 {dimension_numbers = #tpu.dot_dimension_numbers<[1], [0], [0], [1], [0, 0, 1, 1], [], []>} : vector<48x256xbf16>, vector<256x128xbf16>, vector<48x128xf32> -> vector<48x128xf32>
    %c0_36 = arith.constant 0 : index
    %c1 = arith.constant 1 : index
    %c0_37 = arith.constant 0 : index
    %50 = vector.load %arg4[%c0_36, %c1, %c0_37] : memref<3x2x128xf32, #tpu.memory_space<vmem>>, vector<1x1x128xf32>
    %51 = vector.shape_cast %50 : vector<1x1x128xf32> to vector<1x128xf32>
    %52 = vector.broadcast %51 : vector<1x128xf32> to vector<48x128xf32>
    %53 = arith.addf %49, %52 : vector<48x128xf32>
    %cst_38 = arith.constant 2.000000e-01 : f32
    %54 = vector.broadcast %cst_38 : f32 to vector<48x128xf32>
    %55 = arith.mulf %54, %53 : vector<48x128xf32>
    %56 = arith.maximumf %53, %55 : vector<48x128xf32>
    %c3_i32 = arith.constant 3 : i32
    %57 = tpu.dynamic_rotate %56 by %c3_i32 dim 0 : vector<48x128xf32>, i32 -> vector<48x128xf32>
    %c0_39 = arith.constant 0 : index
    %c0_40 = arith.constant 0 : index
    %58 = vector.load %arg7[%c0_39, %c0_40] : memref<48x128xf32, #tpu.memory_space<vmem>>, vector<48x128xf32>
    tpu.vector_store %arg7[%c0_39, %c0_40], %57 {strides = array<i32>} : memref<48x128xf32, #tpu.memory_space<vmem>>, vector<48x128xf32>,
    %c45_i32 = arith.constant 45 : i32
    %59 = tpu.dynamic_rotate %56 by %c45_i32 dim 0 : vector<48x128xf32>, i32 -> vector<48x128xf32>
    %c0_41 = arith.constant 0 : index
    %c0_42 = arith.constant 0 : index
    %60 = vector.load %arg8[%c0_41, %c0_42] : memref<48x128xf32, #tpu.memory_space<vmem>>, vector<48x128xf32>
    tpu.vector_store %arg8[%c0_41, %c0_42], %59 {strides = array<i32>} : memref<48x128xf32, #tpu.memory_space<vmem>>, vector<48x128xf32>,
    %61 = vector.extract_strided_slice %56 {offsets = [19, 0], sizes = [1, 128], strides = [1, 1]} : vector<48x128xf32> to vector<1x128xf32>
    %62 = vector.extract_strided_slice %56 {offsets = [18, 0], sizes = [1, 128], strides = [1, 1]} : vector<48x128xf32> to vector<1x128xf32>
    %63 = vector.extract_strided_slice %56 {offsets = [17, 0], sizes = [1, 128], strides = [1, 1]} : vector<48x128xf32> to vector<1x128xf32>
    %64 = tpu.concatenate %61, %62, %63 in 0 : vector<1x128xf32>, vector<1x128xf32>, vector<1x128xf32> -> vector<3x128xf32>
    %65 = vector.extract_strided_slice %56 {offsets = [13, 0], sizes = [3, 128], strides = [1, 1]} : vector<48x128xf32> to vector<3x128xf32>
    %66 = arith.select %5, %64, %65 : vector<3x128xf32>
    %c16_43 = arith.constant 16 : index
    %c0_44 = arith.constant 0 : index
    %67 = vector.load %arg7[%c16_43, %c0_44] : memref<48x128xf32, #tpu.memory_space<vmem>>, vector<3x128xf32>
    tpu.vector_store %arg7[%c16_43, %c0_44], %66 {strides = array<i32>} : memref<48x128xf32, #tpu.memory_space<vmem>>, vector<3x128xf32>,
    %68 = vector.extract_strided_slice %56 {offsets = [30, 0], sizes = [1, 128], strides = [1, 1]} : vector<48x128xf32> to vector<1x128xf32>
    %69 = vector.extract_strided_slice %56 {offsets = [29, 0], sizes = [1, 128], strides = [1, 1]} : vector<48x128xf32> to vector<1x128xf32>
    %70 = vector.extract_strided_slice %56 {offsets = [28, 0], sizes = [1, 128], strides = [1, 1]} : vector<48x128xf32> to vector<1x128xf32>
    %71 = tpu.concatenate %68, %69, %70 in 0 : vector<1x128xf32>, vector<1x128xf32>, vector<1x128xf32> -> vector<3x128xf32>
    %72 = vector.extract_strided_slice %56 {offsets = [32, 0], sizes = [3, 128], strides = [1, 1]} : vector<48x128xf32> to vector<3x128xf32>
    %73 = arith.select %6, %71, %72 : vector<3x128xf32>
    %c29 = arith.constant 29 : index
    %c0_45 = arith.constant 0 : index
    %74 = vector.load %arg8[%c29, %c0_45] : memref<48x128xf32, #tpu.memory_space<vmem>>, vector<3x128xf32>
    tpu.vector_store %arg8[%c29, %c0_45], %73 {strides = array<i32>} : memref<48x128xf32, #tpu.memory_space<vmem>>, vector<3x128xf32>,
    %c0_46 = arith.constant 0 : index
    %c0_47 = arith.constant 0 : index
    %75 = vector.load %arg7[%c0_46, %c0_47] : memref<48x128xf32, #tpu.memory_space<vmem>>, vector<48x128xf32>
    %76 = arith.truncf %75 : vector<48x128xf32> to vector<48x128xbf16>
    %c0_48 = arith.constant 0 : index
    %c0_49 = arith.constant 0 : index
    %77 = vector.load %arg9[%c0_48, %c0_49] : memref<48x384xbf16, #tpu.memory_space<vmem>>, vector<48x128xbf16>
    tpu.vector_store %arg9[%c0_48, %c0_49], %76 {strides = array<i32>} : memref<48x384xbf16, #tpu.memory_space<vmem>>, vector<48x128xbf16>,
    %78 = arith.truncf %56 : vector<48x128xf32> to vector<48x128xbf16>
    %c0_50 = arith.constant 0 : index
    %c128_51 = arith.constant 128 : index
    %79 = vector.load %arg9[%c0_50, %c128_51] : memref<48x384xbf16, #tpu.memory_space<vmem>>, vector<48x128xbf16>
    tpu.vector_store %arg9[%c0_50, %c128_51], %78 {strides = array<i32>} : memref<48x384xbf16, #tpu.memory_space<vmem>>, vector<48x128xbf16>,
    %c0_52 = arith.constant 0 : index
    %c0_53 = arith.constant 0 : index
    %80 = vector.load %arg8[%c0_52, %c0_53] : memref<48x128xf32, #tpu.memory_space<vmem>>, vector<48x128xf32>
    %81 = arith.truncf %80 : vector<48x128xf32> to vector<48x128xbf16>
    %c0_54 = arith.constant 0 : index
    %c256_55 = arith.constant 256 : index
    %82 = vector.load %arg9[%c0_54, %c256_55] : memref<48x384xbf16, #tpu.memory_space<vmem>>, vector<48x128xbf16>
    tpu.vector_store %arg9[%c0_54, %c256_55], %81 {strides = array<i32>} : memref<48x384xbf16, #tpu.memory_space<vmem>>, vector<48x128xbf16>,
    %c0_56 = arith.constant 0 : index
    %c0_57 = arith.constant 0 : index
    %83 = vector.load %arg9[%c0_56, %c0_57] : memref<48x384xbf16, #tpu.memory_space<vmem>>, vector<48x384xbf16>
    %c1_58 = arith.constant 1 : index
    %c0_59 = arith.constant 0 : index
    %c0_60 = arith.constant 0 : index
    %84 = vector.load %arg3[%c1_58, %c0_59, %c0_60] : memref<3x640x128xbf16, #tpu.memory_space<vmem>>, vector<1x384x128xbf16>
    %85 = vector.shape_cast %84 : vector<1x384x128xbf16> to vector<384x128xbf16>
    %cst_61 = arith.constant dense<0.000000e+00> : vector<48x128xf32>
    %86 = tpu.matmul %83, %85, %cst_61 {dimension_numbers = #tpu.dot_dimension_numbers<[1], [0], [0], [1], [0, 0, 1, 1], [], []>} : vector<48x384xbf16>, vector<384x128xbf16>, vector<48x128xf32> -> vector<48x128xf32>
    %c1_62 = arith.constant 1 : index
    %c0_63 = arith.constant 0 : index
    %c0_64 = arith.constant 0 : index
    %87 = vector.load %arg4[%c1_62, %c0_63, %c0_64] : memref<3x2x128xf32, #tpu.memory_space<vmem>>, vector<1x1x128xf32>
    %88 = vector.shape_cast %87 : vector<1x1x128xf32> to vector<1x128xf32>
    %89 = vector.broadcast %88 : vector<1x128xf32> to vector<48x128xf32>
    %90 = arith.addf %86, %89 : vector<48x128xf32>
    %cst_65 = arith.constant 2.000000e-01 : f32
    %91 = vector.broadcast %cst_65 : f32 to vector<48x128xf32>
    %92 = arith.mulf %91, %90 : vector<48x128xf32>
    %93 = arith.maximumf %90, %92 : vector<48x128xf32>
    %94 = arith.truncf %93 : vector<48x128xf32> to vector<48x128xbf16>
    %c0_66 = arith.constant 0 : index
    %c0_67 = arith.constant 0 : index
    %95 = vector.load %arg9[%c0_66, %c0_67] : memref<48x384xbf16, #tpu.memory_space<vmem>>, vector<48x128xbf16>
    tpu.vector_store %arg9[%c0_66, %c0_67], %94 {strides = array<i32>} : memref<48x384xbf16, #tpu.memory_space<vmem>>, vector<48x128xbf16>,
    %96 = arith.truncf %53 : vector<48x128xf32> to vector<48x128xbf16>
    %c0_68 = arith.constant 0 : index
    %c128_69 = arith.constant 128 : index
    %97 = vector.load %arg9[%c0_68, %c128_69] : memref<48x384xbf16, #tpu.memory_space<vmem>>, vector<48x128xbf16>
    tpu.vector_store %arg9[%c0_68, %c128_69], %96 {strides = array<i32>} : memref<48x384xbf16, #tpu.memory_space<vmem>>, vector<48x128xbf16>,
    %c0_70 = arith.constant 0 : index
    %c0_71 = arith.constant 0 : index
    %98 = vector.load %arg9[%c0_70, %c0_71] : memref<48x384xbf16, #tpu.memory_space<vmem>>, vector<48x256xbf16>
    %c1_72 = arith.constant 1 : index
    %c384_73 = arith.constant 384 : index
    %c0_74 = arith.constant 0 : index
    %99 = vector.load %arg3[%c1_72, %c384_73, %c0_74] : memref<3x640x128xbf16, #tpu.memory_space<vmem>>, vector<1x256x128xbf16>
    %100 = vector.shape_cast %99 : vector<1x256x128xbf16> to vector<256x128xbf16>
    %cst_75 = arith.constant dense<0.000000e+00> : vector<48x128xf32>
    %101 = tpu.matmul %98, %100, %cst_75 {dimension_numbers = #tpu.dot_dimension_numbers<[1], [0], [0], [1], [0, 0, 1, 1], [], []>} : vector<48x256xbf16>, vector<256x128xbf16>, vector<48x128xf32> -> vector<48x128xf32>
    %c1_76 = arith.constant 1 : index
    %c1_77 = arith.constant 1 : index
    %c0_78 = arith.constant 0 : index
    %102 = vector.load %arg4[%c1_76, %c1_77, %c0_78] : memref<3x2x128xf32, #tpu.memory_space<vmem>>, vector<1x1x128xf32>
    %103 = vector.shape_cast %102 : vector<1x1x128xf32> to vector<1x128xf32>
    %104 = vector.broadcast %103 : vector<1x128xf32> to vector<48x128xf32>
    %105 = arith.addf %101, %104 : vector<48x128xf32>
    %cst_79 = arith.constant 2.000000e-01 : f32
    %106 = vector.broadcast %cst_79 : f32 to vector<48x128xf32>
    %107 = arith.mulf %106, %105 : vector<48x128xf32>
    %108 = arith.maximumf %105, %107 : vector<48x128xf32>
    %c9_i32 = arith.constant 9 : i32
    %109 = tpu.dynamic_rotate %108 by %c9_i32 dim 0 : vector<48x128xf32>, i32 -> vector<48x128xf32>
    %c0_80 = arith.constant 0 : index
    %c0_81 = arith.constant 0 : index
    %110 = vector.load %arg7[%c0_80, %c0_81] : memref<48x128xf32, #tpu.memory_space<vmem>>, vector<48x128xf32>
    tpu.vector_store %arg7[%c0_80, %c0_81], %109 {strides = array<i32>} : memref<48x128xf32, #tpu.memory_space<vmem>>, vector<48x128xf32>,
    %c39_i32 = arith.constant 39 : i32
    %111 = tpu.dynamic_rotate %108 by %c39_i32 dim 0 : vector<48x128xf32>, i32 -> vector<48x128xf32>
    %c0_82 = arith.constant 0 : index
    %c0_83 = arith.constant 0 : index
    %112 = vector.load %arg8[%c0_82, %c0_83] : memref<48x128xf32, #tpu.memory_space<vmem>>, vector<48x128xf32>
    tpu.vector_store %arg8[%c0_82, %c0_83], %111 {strides = array<i32>} : memref<48x128xf32, #tpu.memory_space<vmem>>, vector<48x128xf32>,
    %113 = vector.extract_strided_slice %108 {offsets = [25, 0], sizes = [1, 128], strides = [1, 1]} : vector<48x128xf32> to vector<1x128xf32>
    %114 = vector.extract_strided_slice %108 {offsets = [24, 0], sizes = [1, 128], strides = [1, 1]} : vector<48x128xf32> to vector<1x128xf32>
    %115 = vector.extract_strided_slice %108 {offsets = [23, 0], sizes = [1, 128], strides = [1, 1]} : vector<48x128xf32> to vector<1x128xf32>
    %116 = vector.extract_strided_slice %108 {offsets = [22, 0], sizes = [1, 128], strides = [1, 1]} : vector<48x128xf32> to vector<1x128xf32>
    %117 = vector.extract_strided_slice %108 {offsets = [21, 0], sizes = [1, 128], strides = [1, 1]} : vector<48x128xf32> to vector<1x128xf32>
    %118 = vector.extract_strided_slice %108 {offsets = [20, 0], sizes = [1, 128], strides = [1, 1]} : vector<48x128xf32> to vector<1x128xf32>
    %119 = vector.extract_strided_slice %108 {offsets = [19, 0], sizes = [1, 128], strides = [1, 1]} : vector<48x128xf32> to vector<1x128xf32>
    %120 = vector.extract_strided_slice %108 {offsets = [18, 0], sizes = [1, 128], strides = [1, 1]} : vector<48x128xf32> to vector<1x128xf32>
    %121 = vector.extract_strided_slice %108 {offsets = [17, 0], sizes = [1, 128], strides = [1, 1]} : vector<48x128xf32> to vector<1x128xf32>
    %122 = tpu.concatenate %113, %114, %115, %116, %117, %118, %119, %120, %121 in 0 : vector<1x128xf32>, vector<1x128xf32>, vector<1x128xf32>, vector<1x128xf32>, vector<1x128xf32>, vector<1x128xf32>, vector<1x128xf32>, vector<1x128xf32>, vector<1x128xf32> -> vector<9x128xf32>
    %123 = vector.extract_strided_slice %108 {offsets = [7, 0], sizes = [9, 128], strides = [1, 1]} : vector<48x128xf32> to vector<9x128xf32>
    %124 = arith.select %5, %122, %123 : vector<9x128xf32>
    %c16_84 = arith.constant 16 : index
    %c0_85 = arith.constant 0 : index
    %125 = vector.load %arg7[%c16_84, %c0_85] : memref<48x128xf32, #tpu.memory_space<vmem>>, vector<9x128xf32>
    tpu.vector_store %arg7[%c16_84, %c0_85], %124 {strides = array<i32>} : memref<48x128xf32, #tpu.memory_space<vmem>>, vector<9x128xf32>,
    %126 = vector.extract_strided_slice %108 {offsets = [30, 0], sizes = [1, 128], strides = [1, 1]} : vector<48x128xf32> to vector<1x128xf32>
    %127 = vector.extract_strided_slice %108 {offsets = [29, 0], sizes = [1, 128], strides = [1, 1]} : vector<48x128xf32> to vector<1x128xf32>
    %128 = vector.extract_strided_slice %108 {offsets = [28, 0], sizes = [1, 128], strides = [1, 1]} : vector<48x128xf32> to vector<1x128xf32>
    %129 = vector.extract_strided_slice %108 {offsets = [27, 0], sizes = [1, 128], strides = [1, 1]} : vector<48x128xf32> to vector<1x128xf32>
    %130 = vector.extract_strided_slice %108 {offsets = [26, 0], sizes = [1, 128], strides = [1, 1]} : vector<48x128xf32> to vector<1x128xf32>
    %131 = vector.extract_strided_slice %108 {offsets = [25, 0], sizes = [1, 128], strides = [1, 1]} : vector<48x128xf32> to vector<1x128xf32>
    %132 = vector.extract_strided_slice %108 {offsets = [24, 0], sizes = [1, 128], strides = [1, 1]} : vector<48x128xf32> to vector<1x128xf32>
    %133 = vector.extract_strided_slice %108 {offsets = [23, 0], sizes = [1, 128], strides = [1, 1]} : vector<48x128xf32> to vector<1x128xf32>
    %134 = vector.extract_strided_slice %108 {offsets = [22, 0], sizes = [1, 128], strides = [1, 1]} : vector<48x128xf32> to vector<1x128xf32>
    %135 = tpu.concatenate %126, %127, %128, %129, %130, %131, %132, %133, %134 in 0 : vector<1x128xf32>, vector<1x128xf32>, vector<1x128xf32>, vector<1x128xf32>, vector<1x128xf32>, vector<1x128xf32>, vector<1x128xf32>, vector<1x128xf32>, vector<1x128xf32> -> vector<9x128xf32>
    %136 = vector.extract_strided_slice %108 {offsets = [32, 0], sizes = [9, 128], strides = [1, 1]} : vector<48x128xf32> to vector<9x128xf32>
    %137 = arith.select %6, %135, %136 : vector<9x128xf32>
    %c23 = arith.constant 23 : index
    %c0_86 = arith.constant 0 : index
    %138 = vector.load %arg8[%c23, %c0_86] : memref<48x128xf32, #tpu.memory_space<vmem>>, vector<9x128xf32>
    tpu.vector_store %arg8[%c23, %c0_86], %137 {strides = array<i32>} : memref<48x128xf32, #tpu.memory_space<vmem>>, vector<9x128xf32>,
    %c0_87 = arith.constant 0 : index
    %c0_88 = arith.constant 0 : index
    %139 = vector.load %arg7[%c0_87, %c0_88] : memref<48x128xf32, #tpu.memory_space<vmem>>, vector<48x128xf32>
    %140 = arith.truncf %139 : vector<48x128xf32> to vector<48x128xbf16>
    %c0_89 = arith.constant 0 : index
    %c0_90 = arith.constant 0 : index
    %141 = vector.load %arg9[%c0_89, %c0_90] : memref<48x384xbf16, #tpu.memory_space<vmem>>, vector<48x128xbf16>
    tpu.vector_store %arg9[%c0_89, %c0_90], %140 {strides = array<i32>} : memref<48x384xbf16, #tpu.memory_space<vmem>>, vector<48x128xbf16>,
    %142 = arith.truncf %108 : vector<48x128xf32> to vector<48x128xbf16>
    %c0_91 = arith.constant 0 : index
    %c128_92 = arith.constant 128 : index
    %143 = vector.load %arg9[%c0_91, %c128_92] : memref<48x384xbf16, #tpu.memory_space<vmem>>, vector<48x128xbf16>
    tpu.vector_store %arg9[%c0_91, %c128_92], %142 {strides = array<i32>} : memref<48x384xbf16, #tpu.memory_space<vmem>>, vector<48x128xbf16>,
    %c0_93 = arith.constant 0 : index
    %c0_94 = arith.constant 0 : index
    %144 = vector.load %arg8[%c0_93, %c0_94] : memref<48x128xf32, #tpu.memory_space<vmem>>, vector<48x128xf32>
    %145 = arith.truncf %144 : vector<48x128xf32> to vector<48x128xbf16>
    %c0_95 = arith.constant 0 : index
    %c256_96 = arith.constant 256 : index
    %146 = vector.load %arg9[%c0_95, %c256_96] : memref<48x384xbf16, #tpu.memory_space<vmem>>, vector<48x128xbf16>
    tpu.vector_store %arg9[%c0_95, %c256_96], %145 {strides = array<i32>} : memref<48x384xbf16, #tpu.memory_space<vmem>>, vector<48x128xbf16>,
    %c0_97 = arith.constant 0 : index
    %c0_98 = arith.constant 0 : index
    %147 = vector.load %arg9[%c0_97, %c0_98] : memref<48x384xbf16, #tpu.memory_space<vmem>>, vector<48x384xbf16>
    %c2 = arith.constant 2 : index
    %c0_99 = arith.constant 0 : index
    %c0_100 = arith.constant 0 : index
    %148 = vector.load %arg3[%c2, %c0_99, %c0_100] : memref<3x640x128xbf16, #tpu.memory_space<vmem>>, vector<1x384x128xbf16>
    %149 = vector.shape_cast %148 : vector<1x384x128xbf16> to vector<384x128xbf16>
    %cst_101 = arith.constant dense<0.000000e+00> : vector<48x128xf32>
    %150 = tpu.matmul %147, %149, %cst_101 {dimension_numbers = #tpu.dot_dimension_numbers<[1], [0], [0], [1], [0, 0, 1, 1], [], []>} : vector<48x384xbf16>, vector<384x128xbf16>, vector<48x128xf32> -> vector<48x128xf32>
    %c2_102 = arith.constant 2 : index
    %c0_103 = arith.constant 0 : index
    %c0_104 = arith.constant 0 : index
    %151 = vector.load %arg4[%c2_102, %c0_103, %c0_104] : memref<3x2x128xf32, #tpu.memory_space<vmem>>, vector<1x1x128xf32>
    %152 = vector.shape_cast %151 : vector<1x1x128xf32> to vector<1x128xf32>
    %153 = vector.broadcast %152 : vector<1x128xf32> to vector<48x128xf32>
    %154 = arith.addf %150, %153 : vector<48x128xf32>
    %cst_105 = arith.constant 2.000000e-01 : f32
    %155 = vector.broadcast %cst_105 : f32 to vector<48x128xf32>
    %156 = arith.mulf %155, %154 : vector<48x128xf32>
    %157 = arith.maximumf %154, %156 : vector<48x128xf32>
    %158 = arith.truncf %157 : vector<48x128xf32> to vector<48x128xbf16>
    %c0_106 = arith.constant 0 : index
    %c0_107 = arith.constant 0 : index
    %159 = vector.load %arg9[%c0_106, %c0_107] : memref<48x384xbf16, #tpu.memory_space<vmem>>, vector<48x128xbf16>
    tpu.vector_store %arg9[%c0_106, %c0_107], %158 {strides = array<i32>} : memref<48x384xbf16, #tpu.memory_space<vmem>>, vector<48x128xbf16>,
    %160 = arith.truncf %105 : vector<48x128xf32> to vector<48x128xbf16>
    %c0_108 = arith.constant 0 : index
    %c128_109 = arith.constant 128 : index
    %161 = vector.load %arg9[%c0_108, %c128_109] : memref<48x384xbf16, #tpu.memory_space<vmem>>, vector<48x128xbf16>
    tpu.vector_store %arg9[%c0_108, %c128_109], %160 {strides = array<i32>} : memref<48x384xbf16, #tpu.memory_space<vmem>>, vector<48x128xbf16>,
    %c0_110 = arith.constant 0 : index
    %c0_111 = arith.constant 0 : index
    %162 = vector.load %arg9[%c0_110, %c0_111] : memref<48x384xbf16, #tpu.memory_space<vmem>>, vector<48x256xbf16>
    %c2_112 = arith.constant 2 : index
    %c384_113 = arith.constant 384 : index
    %c0_114 = arith.constant 0 : index
    %163 = vector.load %arg3[%c2_112, %c384_113, %c0_114] : memref<3x640x128xbf16, #tpu.memory_space<vmem>>, vector<1x256x128xbf16>
    %164 = vector.shape_cast %163 : vector<1x256x128xbf16> to vector<256x128xbf16>
    %cst_115 = arith.constant dense<0.000000e+00> : vector<48x128xf32>
    %165 = tpu.matmul %162, %164, %cst_115 {dimension_numbers = #tpu.dot_dimension_numbers<[1], [0], [0], [1], [0, 0, 1, 1], [], []>} : vector<48x256xbf16>, vector<256x128xbf16>, vector<48x128xf32> -> vector<48x128xf32>
    %c2_116 = arith.constant 2 : index
    %c1_117 = arith.constant 1 : index
    %c0_118 = arith.constant 0 : index
    %166 = vector.load %arg4[%c2_116, %c1_117, %c0_118] : memref<3x2x128xf32, #tpu.memory_space<vmem>>, vector<1x1x128xf32>
    %167 = vector.shape_cast %166 : vector<1x1x128xf32> to vector<1x128xf32>
    %168 = vector.broadcast %167 : vector<1x128xf32> to vector<48x128xf32>
    %169 = arith.addf %165, %168 : vector<48x128xf32>
    %170 = vector.extract_strided_slice %169 {offsets = [16, 0], sizes = [16, 128], strides = [1, 1]} : vector<48x128xf32> to vector<16x128xf32>
    %c0_119 = arith.constant 0 : index
    %c0_120 = arith.constant 0 : index
    %c0_121 = arith.constant 0 : index
    %171 = vector.load %arg5[%c0_119, %c0_120, %c0_121] : memref<1x16x128xf32, #tpu.memory_space<vmem>>, vector<1x16x128xf32>
    %172 = vector.shape_cast %171 : vector<1x16x128xf32> to vector<16x128xf32>
    %173 = vector.shape_cast %170 : vector<16x128xf32> to vector<1x16x128xf32>
    tpu.vector_store %arg5[%c0_119, %c0_120, %c0_121], %173 {strides = array<i32>} : memref<1x16x128xf32, #tpu.memory_space<vmem>>, vector<1x16x128xf32>,
    return
  }
  func.func @transform_1(%arg0: i32, %arg1: i32) -> (i32, i32, i32) {
    %c0_i32 = arith.constant 0 : i32
    %c0_i32_0 = arith.constant 0 : i32
    %c0_i32_1 = arith.constant 0 : i32
    %c0_i32_2 = arith.constant 0 : i32
    return %c0_i32, %c0_i32_0, %c0_i32_1 : i32, i32, i32
  }
  func.func @transform_2(%arg0: i32, %arg1: i32) -> (i32, i32, i32) {
    %c0_i32 = arith.constant 0 : i32
    %c0_i32_0 = arith.constant 0 : i32
    %c0_i32_1 = arith.constant 0 : i32
    %c0_i32_2 = arith.constant 0 : i32
    return %c0_i32, %c0_i32_0, %c0_i32_1 : i32, i32, i32
  }
  func.func @transform_3(%arg0: i32, %arg1: i32) -> (i32, i32, i32) {
    %c0_i32 = arith.constant 0 : i32
    %c0_i32_0 = arith.constant 0 : i32
    return %arg0, %arg1, %c0_i32 : i32, i32, i32
  }
}

</mosaic_0001>

<llo_original>
// kernel: tpu_custom_call.1
$region0: #{tpu_custom_call.1}
  #allocation0 [shape = 'u32[]', space=smem, size = 0x4, offset = 0x4, fixed_abs, tag = 'smem constant byte address 0x4 - core index']
  #allocation1 [shape = 'u32[72,128]{1,0:T(1,128)}', space=vmem, size = 0x9000, scoped, tag = 'internal scratch']
  #allocation2 [shape = 'f32[48,128]{1,0:T(8,128)}', space=vmem, size = 0x6000, scoped, tag = 'scratch operand']
  #allocation3 [shape = 'f32[48,128]{1,0:T(8,128)}', space=vmem, size = 0x6000, scoped, tag = 'scratch operand']
  #allocation4 [shape = 'f32[48,128]{1,0:T(8,128)}', space=vmem, size = 0x6000, scoped, tag = 'scratch operand']
  #allocation5 [shape = 'bf16[48,384]{1,0:T(8,128)(2,1)}', space=vmem, size = 0x9000, scoped, tag = 'scratch operand']
  #allocation6 [shape = 's32[1]{0}', space=sflag, size = 0x4, scoped, tag = 'scratch operand']
  #allocation13 [shape = 's32[]', space=sflag, size = 0x4, offset = 0, fixed_abs, tag = 'sflag constant byte address 0x0 - dummy sync flag']
  #allocation14 [shape = 's32[]', space=sflag, size = 0x4, offset = 0, fixed_abs, tag = 'sflag constant byte address 0x0 - dummy sync flag']
  #allocation15 [shape = 'u32[]', space=smem, size = 0x4, offset = 0x44, fixed_abs, tag = 'smem constant byte address 0x44 - assertion arg 0']
  #allocation16 [shape = 'u32[]', space=smem, size = 0x4, offset = 0x48, fixed_abs, tag = 'smem constant byte address 0x48 - assertion arg 1']
  %s0 = inlined_call_operand.hbm [shape: f32[2,80,128], index: 0, kind: input, shape index: {}]
  %s1 = inlined_call_operand.hbm [shape: bf16[3,640,128], index: 1, kind: input, shape index: {}]
  %s2 = inlined_call_operand.hbm [shape: f32[3,2,128], index: 2, kind: input, shape index: {}]
  %s3 = inlined_call_operand.hbm [shape: f32[2,48,128], index: 3, kind: output, shape index: {}]
  %s4 = sld [smem:[#allocation0]]
  $region53: #{tpu_custom_call.1} parent=0
    _
  %s6 = ssub.s32 1, %s4
  %s7 = scalar_select 0, %s6, %s4
  $region1: #{tpu_custom_call.1} parent=0
    #allocation7 [shape = 'u8[491520]{0}', space=vmem, size = 0x78000, scoped, tag = 'input window, operand 1, single buffered']
    #allocation8 [shape = 's32[2]{0}', space=sflag, size = 0x8, scoped, tag = 'scoped memory for tpu_custom_call.1']
    #allocation9 [shape = 's32[2]{0}', space=sflag, size = 0x8, scoped, tag = 'scoped memory for tpu_custom_call.1']
    #allocation10 [shape = 'u8[3072]{0}', space=vmem, size = 0xc00, scoped, tag = 'input window, operand 2, single buffered']
    #allocation11 [shape = 's32[1]{0}', space=sflag, size = 0x4, scoped, tag = 'scoped memory for tpu_custom_call.1']
    #allocation12 [shape = 'u8[16384]{0}', space=vmem, size = 0x4000, scoped, tag = 'output window, operand 0']
    %8 = vsyncpa [#allocation8], 0
    %9 = vsyncpa [#allocation11], 0
    %10 = vsyncpa [#allocation9], 0
    %s11 = scalar_lea.sflag [#allocation9], 1
    %12 = vsyncpa %s11, 0
    loop: start=0, step=1, limit=8
    $region2: #{tpu_custom_call.1} parent=1 // loop_pre_header
      _
    $region3: #{tpu_custom_call.1} parent=1 // loop_header
      %s14 = sphi 0, %s18
      %p15 = scmp.ge.s32.totalorder %s14, 8
      %s21 = sphi 0, %s33
      %s22 = sphi 0, %s29
      %s23 = sphi 0, %s21
      %s24 = sphi 0, %s22
      %s25 = sphi 0, %s23
      %s26 = sphi 0, %s24
      %s34 = sphi 0, %s34
      %s36 = sphi 0, %s34
      %s37 = sphi 0, %s36
      %s51 = sphi 0, %s37
      %s55 = sphi 0, %s55
      %s57 = sphi 0, %s55
      %s58 = sphi 0, %s57
      %s72 = sphi 0, %s58
      %s80 = sphi 0, %s82
      %s83 = sphi 0, %s80
      %s84 = sphi 0, %s83
      %s100 = sphi 0, %s84
    $region4: #{tpu_custom_call.1} parent=1 // loop_header_branch
      %17 = sbr.rel (%p15) target = $region8
    $region5: #{tpu_custom_call.1} parent=1 // loop_body
      %s19 = ssub.s32 %s14, 1
      %s20 = ssub.s32 %s14, 2
      %s27 = sadd.s32 1, %s22
      %p28 = scmp.ge.s32.totalorder %s27, 3
      %s29 = scalar_select %p28, 0, %s27
      %s30 = sadd.s32 1, %s21
      %s31 = scalar_select %p28, %s30, %s21
      %p32 = scmp.ge.s32.totalorder %s31, 2
      %s33 = scalar_select %p32, 0, %s31
      %s35 = sadd.s32 %s34, 1
      %p38 = scmp.eq.s32.totalorder %s14, 5
      %p39 = scmp.ne.s32.totalorder %s34, %s36
      %p40 = scmp.eq.s32.totalorder %s14, 0
      %p41 = por %p39, %p40
      %p42 = scmp.ne.s32.totalorder %s34, %s36
      %p43 = scmp.eq.s32.totalorder %s19, 5
      %p44 = por %p42, %p43
      %p45 = scmp.ne.s32.totalorder %s36, %s37
      %p46 = scmp.eq.s32.totalorder %s19, 0
      %p47 = por %p45, %p46
      %p48 = scmp.ne.s32.totalorder %s36, %s37
      %p49 = scmp.eq.s32.totalorder %s20, 5
      %p50 = por %p48, %p49
      %p52 = scmp.ne.s32.totalorder %s37, %s51
      %p53 = scmp.eq.s32.totalorder %s20, 0
      %p54 = por %p52, %p53
      %s56 = sadd.s32 %s55, 1
      %p59 = scmp.eq.s32.totalorder %s14, 5
      %p60 = scmp.ne.s32.totalorder %s55, %s57
      %p61 = scmp.eq.s32.totalorder %s14, 0
      %p62 = por %p60, %p61
      %p63 = scmp.ne.s32.totalorder %s55, %s57
      %p64 = scmp.eq.s32.totalorder %s19, 5
      %p65 = por %p63, %p64
      %p66 = scmp.ne.s32.totalorder %s57, %s58
      %p67 = scmp.eq.s32.totalorder %s19, 0
      %p68 = por %p66, %p67
      %p69 = scmp.ne.s32.totalorder %s57, %s58
      %p70 = scmp.eq.s32.totalorder %s20, 5
      %p71 = por %p69, %p70
      %p73 = scmp.ne.s32.totalorder %s58, %s72
      %p74 = scmp.eq.s32.totalorder %s20, 0
      %p75 = por %p73, %p74
      %s76 = ssub.s32 %s21, %s33
      %s77 = ssub.s32 %s22, %s29
      %s78 = sor.u32 %s76, %s77
      %p79 = scmp.eq.s32.totalorder %s78, 0
      %s81 = sadd.s32 %s80, 1
      %s82 = scalar_select %p79, %s80, %s81
      %p85 = pneg %p79
      %p86 = scmp.eq.s32.totalorder %s14, 5
      %p87 = por %p85, %p86
      %p88 = scmp.ne.s32.totalorder %s80, %s83
      %p89 = scmp.eq.s32.totalorder %s14, 0
      %p90 = por %p88, %p89
      %p91 = scmp.ne.s32.totalorder %s80, %s83
      %p92 = scmp.eq.s32.totalorder %s19, 5
      %p93 = por %p91, %p92
      %p94 = scmp.ne.s32.totalorder %s83, %s84
      %p95 = scmp.eq.s32.totalorder %s19, 0
      %p96 = por %p94, %p95
      %p97 = scmp.ne.s32.totalorder %s83, %s84
      %p98 = scmp.eq.s32.totalorder %s20, 5
      %p99 = por %p97, %p98
      %p101 = scmp.ne.s32.totalorder %s84, %s100
      %p102 = scmp.eq.s32.totalorder %s20, 0
      %p103 = por %p101, %p102
      %p104 = scmp.le.s32.totalorder 1, %s14
      %p105 = scmp.lt.s32.totalorder %s14, 7
      %p106 = pnand %p104, %p105
      %p107 = pneg %p106
      // Predicated region
      $region9: #{tpu_custom_call.1} parent=5 // pred_check
        _
      $region10: #{tpu_custom_call.1} parent=5 // pred_check_branch
        %109 = sbr.rel (%p106) target = $region12
      $region11: #{tpu_custom_call.1} parent=5 // pred_region
        %s110 = ssub.s32 %s14, 1
        // Predicated region
        $region13: #{tpu_custom_call.1} parent=11 // pred_check
          %p111 = pneg %p47
        $region14: #{tpu_custom_call.1} parent=11 // pred_check_branch
          %113 = sbr.rel (%p111) target = $region16
        $region15: #{tpu_custom_call.1} parent=11 // pred_region
          %115 = vsyncadd [#allocation8], 0
          %s116 = sshll.u32 %s1, 4
          %s117 = int_to_ptr.hbm [resolvable:$true] %s116
          %s118 = sshll.u32 [#allocation7], 4
          %s119 = int_to_ptr.vmem [resolvable:$true] %s118
          %124 = dma.hbm_to_vmem [thread:$0]  %s117, 15360, %s119, [#allocation8], 64, 64, 4
        $region16: #{tpu_custom_call.1} parent=11 // pred_fallthru
          _
        // Predicated region
        $region17: #{tpu_custom_call.1} parent=11 // pred_check
          %p125 = pneg %p68
        $region18: #{tpu_custom_call.1} parent=11 // pred_check_branch
          %127 = sbr.rel (%p125) target = $region20
        $region19: #{tpu_custom_call.1} parent=11 // pred_region
          %129 = vsyncadd [#allocation11], 0
          %s130 = sshll.u32 %s2, 4
          %s131 = int_to_ptr.hbm [resolvable:$true] %s130
          %s132 = sshll.u32 [#allocation10], 4
          %s133 = int_to_ptr.vmem [resolvable:$true] %s132
          %138 = dma.hbm_to_vmem [thread:$0]  %s131, 96, %s133, [#allocation11], 32, 32, 2
        $region20: #{tpu_custom_call.1} parent=11 // pred_fallthru
          _
      $region12: #{tpu_custom_call.1} parent=5 // pred_fallthru
        _
      %p139 = scmp.lt.s32.totalorder %s14, 6
      // Predicated region
      $region21: #{tpu_custom_call.1} parent=5 // pred_check
        %p140 = pneg %p139
      $region22: #{tpu_custom_call.1} parent=5 // pred_check_branch
        %142 = sbr.rel (%p140) target = $region24
      $region23: #{tpu_custom_call.1} parent=5 // pred_region
        _
      $region24: #{tpu_custom_call.1} parent=5 // pred_fallthru
        _
      %p143 = scmp.le.s32.totalorder 1, %s14
      %p144 = scmp.lt.s32.totalorder %s14, 7
      %p145 = pnand %p143, %p144
      %p146 = pneg %p145
      // Predicated region
      $region25: #{tpu_custom_call.1} parent=5 // pred_check
        _
      $region26: #{tpu_custom_call.1} parent=5 // pred_check_branch
        %148 = sbr.rel (%p145) target = $region28
      $region27: #{tpu_custom_call.1} parent=5 // pred_region
        %s149 = ssub.s32 %s14, 1
        // Predicated region
        $region29: #{tpu_custom_call.1} parent=27 // pred_check
          %p150 = pneg %p47
        $region30: #{tpu_custom_call.1} parent=27 // pred_check_branch
          %152 = sbr.rel (%p150) target = $region32
        $region31: #{tpu_custom_call.1} parent=27 // pred_region
          %154 = dma.done [#allocation8], 15360
        $region32: #{tpu_custom_call.1} parent=27 // pred_fallthru
          _
        // Predicated region
        $region33: #{tpu_custom_call.1} parent=27 // pred_check
          %p155 = pneg %p68
        $region34: #{tpu_custom_call.1} parent=27 // pred_check_branch
          %157 = sbr.rel (%p155) target = $region36
        $region35: #{tpu_custom_call.1} parent=27 // pred_region
          %159 = dma.done [#allocation11], 96
        $region36: #{tpu_custom_call.1} parent=27 // pred_fallthru
          _
        %p160 = pneg %p47
        %p161 = pneg %p44
        %p162 = pneg %p68
        %p163 = pneg %p65
        %p164 = pneg %p96
        %p165 = pneg %p93
        %s166 = sand.u32 %s83, 1
        %s167 = scalar_lea.sflag [#allocation9], %s166
        %s168 = sand.u32 %s83, 1
        %s169 = smul.addr %s168, 16
        %s170 = scalar_lea.vmem [#allocation12], %s169
        %s171 = smul.u32 2, %s24
        %s172 = smul.u32 %s24, 16
        %s173 = smul.u32 %s23, 80
        %s174 = sadd.s32 %s172, %s173
        %s175 = scalar_lea.hbm %s0, %s174
        // Predicated region
        $region37: #{tpu_custom_call.1} parent=27 // pred_check
          _
        $region38: #{tpu_custom_call.1} parent=27 // pred_check_branch
          %177 = sbr.rel target = $region40
        $region39: #{tpu_custom_call.1} parent=27 // pred_region
          %178 = sst [smem:[#allocation15]] [#allocation14]
          %179 = sst [smem:[#allocation16]] [#allocation13]
        $region40: #{tpu_custom_call.1} parent=27 // pred_fallthru
          _
        %181 = shalt.err (0)
        %s183 = sshll.u32 %s175, 4
        %s184 = int_to_ptr.hbm [resolvable:$true] %s183
        %s185 = sshll.u32 [#allocation2], 4
        %s186 = int_to_ptr.vmem [resolvable:$true] %s185
        %188 = dma.hbm_to_vmem [thread:$0]  %s184, 768, %s186, [#allocation6]
        %s189 = smul.u32 48, 1
        %s190 = sshll.u32 %s189, 4
        %191 = dma.done [#allocation6], %s190
        %p192 = scmp.eq.s32.totalorder %s24, 0
        %p193 = scmp.eq.s32.totalorder %s24, 2
        %v194 = vld [vmem:[#allocation2] sm:$0xff]
        %v195 = vld [vmem:[#allocation2 + $0x8] sm:$0xff]
        %v196 = vld [vmem:[#allocation2 + $0x10] sm:$0xff]
        %v197 = vld [vmem:[#allocation2 + $0x18] sm:$0xff]
        %v198 = vld [vmem:[#allocation2 + $0x20] sm:$0xff]
        %v199 = vld [vmem:[#allocation2 + $0x28] sm:$0xff]
        %v200 = vmul.f32 %v194, 0.2
        %v201 = vmul.f32 %v195, 0.2
        %v202 = vmul.f32 %v196, 0.2
        %v203 = vmul.f32 %v197, 0.2
        %v204 = vmul.f32 %v198, 0.2
        %v205 = vmul.f32 %v199, 0.2
        %v206 = vmax.f32 %v194, %v200
        %v207 = vmax.f32 %v195, %v201
        %v208 = vmax.f32 %v196, %v202
        %v209 = vmax.f32 %v197, %v203
        %v210 = vmax.f32 %v198, %v204
        %v211 = vmax.f32 %v199, %v205
        %v212 = vrot.slane %v206, 7
        %v213 = vrot.slane %v207, 7
        %v214 = vrot.slane %v208, 7
        %v215 = vrot.slane %v209, 7
        %v216 = vrot.slane %v210, 7
        %v217 = vrot.slane %v211, 7
        %v218 = vlaneseq
        %v219 = vshrl.u32 %v218, 7
        %vm220 = vcmp.lt.s32.totalorder %v219, 1
        %v221 = vsel %vm220, %v216, %v217
        %v222 = vsel %vm220, %v215, %v216
        %v223 = vsel %vm220, %v214, %v215
        %v224 = vsel %vm220, %v213, %v214
        %v225 = vsel %vm220, %v212, %v213
        %v226 = vsel %vm220, %v217, %v212
        %227 = vst [vmem:[#allocation3] sm:$0xff] %v226
        %228 = vst [vmem:[#allocation3 + $0x8] sm:$0xff] %v225
        %229 = vst [vmem:[#allocation3 + $0x10] sm:$0xff] %v224
        %230 = vst [vmem:[#allocation3 + $0x18] sm:$0xff] %v223
        %231 = vst [vmem:[#allocation3 + $0x20] sm:$0xff] %v222
        %232 = vst [vmem:[#allocation3 + $0x28] sm:$0xff] %v221
        %v233 = vrot.slane %v206, 1
        %v234 = vrot.slane %v207, 1
        %v235 = vrot.slane %v208, 1
        %v236 = vrot.slane %v209, 1
        %v237 = vrot.slane %v210, 1
        %v238 = vrot.slane %v211, 1
        %vm239 = vcmp.lt.s32.totalorder %v219, 7
        %v240 = vsel %vm239, %v237, %v238
        %v241 = vsel %vm239, %v236, %v237
        %v242 = vsel %vm239, %v235, %v236
        %v243 = vsel %vm239, %v234, %v235
        %v244 = vsel %vm239, %v233, %v234
        %v245 = vsel %vm239, %v238, %v233
        %246 = vst [vmem:[#allocation4] sm:$0xff] %v244
        %247 = vst [vmem:[#allocation4 + $0x8] sm:$0xff] %v243
        %248 = vst [vmem:[#allocation4 + $0x10] sm:$0xff] %v242
        %249 = vst [vmem:[#allocation4 + $0x18] sm:$0xff] %v241
        %250 = vst [vmem:[#allocation4 + $0x20] sm:$0xff] %v240
        %251 = vst [vmem:[#allocation4 + $0x28] sm:$0xff] %v245
        %s252 = scalar_select %p192, 1, 0
        %v253 = vstv %s252
        %vm254 = vcmp.eq.s32.totalorder %v253, 1
        %v256 = vrot.slane %v207, 6
        %v258 = vsel %vm254, %v208, %v256
        %259 = vst [vmem:[#allocation3 + $0xf] sm:$0x2] %v258
        %s260 = scalar_select %p193, 1, 0
        %v261 = vstv %s260
        %vm262 = vcmp.eq.s32.totalorder %v261, 1
        %v264 = vrot.slane %v210, 2
        %v266 = vsel %vm262, %v209, %v264
        %267 = vst [vmem:[#allocation4 + $0x19] sm:$0x40] %v266
        %v268 = vld [vmem:[#allocation3] sm:$0xff]
        %v269 = vld [vmem:[#allocation3 + $0x8] sm:$0xff]
        %v270 = vld [vmem:[#allocation3 + $0x10] sm:$0xff]
        %v271 = vld [vmem:[#allocation3 + $0x18] sm:$0xff]
        %v272 = vld [vmem:[#allocation3 + $0x20] sm:$0xff]
        %v273 = vld [vmem:[#allocation3 + $0x28] sm:$0xff]
        %v274 = vpack.c.bf16 %v268, %v268
        %v275 = vpack.c.bf16 %v269, %v269
        %v276 = vpack.c.bf16 %v270, %v270
        %v277 = vpack.c.bf16 %v271, %v271
        %v278 = vpack.c.bf16 %v272, %v272
        %v279 = vpack.c.bf16 %v273, %v273
        %280 = vst [vmem:[#allocation5] sm:$0xf] %v274
        %281 = vst [vmem:[#allocation5 + $0xc] sm:$0xf] %v275
        %282 = vst [vmem:[#allocation5 + $0x18] sm:$0xf] %v276
        %283 = vst [vmem:[#allocation5 + $0x24] sm:$0xf] %v277
        %284 = vst [vmem:[#allocation5 + $0x30] sm:$0xf] %v278
        %285 = vst [vmem:[#allocation5 + $0x3c] sm:$0xf] %v279
        %v286 = vpack.c.bf16 %v206, %v206
        %v287 = vpack.c.bf16 %v207, %v207
        %v288 = vpack.c.bf16 %v208, %v208
        %v289 = vpack.c.bf16 %v209, %v209
        %v290 = vpack.c.bf16 %v210, %v210
        %v291 = vpack.c.bf16 %v211, %v211
        %292 = vst [vmem:[#allocation5 + $0x4] sm:$0xf] %v286
        %293 = vst [vmem:[#allocation5 + $0x10] sm:$0xf] %v287
        %294 = vst [vmem:[#allocation5 + $0x1c] sm:$0xf] %v288
        %295 = vst [vmem:[#allocation5 + $0x28] sm:$0xf] %v289
        %296 = vst [vmem:[#allocation5 + $0x34] sm:$0xf] %v290
        %297 = vst [vmem:[#allocation5 + $0x40] sm:$0xf] %v291
        %v298 = vld [vmem:[#allocation4] sm:$0xff]
        %v299 = vld [vmem:[#allocation4 + $0x8] sm:$0xff]
        %v300 = vld [vmem:[#allocation4 + $0x10] sm:$0xff]
        %v301 = vld [vmem:[#allocation4 + $0x18] sm:$0xff]
        %v302 = vld [vmem:[#allocation4 + $0x20] sm:$0xff]
        %v303 = vld [vmem:[#allocation4 + $0x28] sm:$0xff]
        %v304 = vpack.c.bf16 %v298, %v298
        %v305 = vpack.c.bf16 %v299, %v299
        %v306 = vpack.c.bf16 %v300, %v300
        %v307 = vpack.c.bf16 %v301, %v301
        %v308 = vpack.c.bf16 %v302, %v302
        %v309 = vpack.c.bf16 %v303, %v303
        %310 = vst [vmem:[#allocation5 + $0x8] sm:$0xf] %v304
        %311 = vst [vmem:[#allocation5 + $0x14] sm:$0xf] %v305
        %312 = vst [vmem:[#allocation5 + $0x20] sm:$0xf] %v306
        %313 = vst [vmem:[#allocation5 + $0x2c] sm:$0xf] %v307
        %314 = vst [vmem:[#allocation5 + $0x38] sm:$0xf] %v308
        %315 = vst [vmem:[#allocation5 + $0x44] sm:$0xf] %v309
        %v316 = vld [vmem:[#allocation5] sm:$0xff]
        %v317 = vld [vmem:[#allocation5 + $0x8] sm:$0xf]
        %v318 = vld [vmem:[#allocation5 + $0xc] sm:$0xff]
        %v319 = vld [vmem:[#allocation5 + $0x14] sm:$0xf]
        %v320 = vld [vmem:[#allocation5 + $0x18] sm:$0xff]
        %v321 = vld [vmem:[#allocation5 + $0x20] sm:$0xf]
        %v322 = vld [vmem:[#allocation5 + $0x24] sm:$0xff]
        %v323 = vld [vmem:[#allocation5 + $0x2c] sm:$0xf]
        %v324 = vld [vmem:[#allocation5 + $0x30] sm:$0xff]
        %v325 = vld [vmem:[#allocation5 + $0x38] sm:$0xf]
        %v326 = vld [vmem:[#allocation5 + $0x3c] sm:$0xff]
        %v327 = vld [vmem:[#allocation5 + $0x44] sm:$0xf]
        %v328 = vld [vmem:[#allocation7] sm:$0xf]
        %v329 = vld [vmem:[#allocation7 + $0x4] sm:$0xf]
        %v330 = vld [vmem:[#allocation7 + $0x8] sm:$0xf]
        %v331 = vld [vmem:[#allocation7 + $0xc] sm:$0xf]
        %v332 = vld [vmem:[#allocation7 + $0x10] sm:$0xf]
        %v333 = vld [vmem:[#allocation7 + $0x14] sm:$0xf]
        %v334 = vld [vmem:[#allocation7 + $0x18] sm:$0xf]
        %v335 = vld [vmem:[#allocation7 + $0x1c] sm:$0xf]
        %v336 = vld [vmem:[#allocation7 + $0x20] sm:$0xf]
        %v337 = vld [vmem:[#allocation7 + $0x24] sm:$0xf]
        %v338 = vld [vmem:[#allocation7 + $0x28] sm:$0xf]
        %v339 = vld [vmem:[#allocation7 + $0x2c] sm:$0xf]
        %v340 = vld [vmem:[#allocation7 + $0x30] sm:$0xf]
        %v341 = vld [vmem:[#allocation7 + $0x34] sm:$0xf]
        %v342 = vld [vmem:[#allocation7 + $0x38] sm:$0xf]
        %v343 = vld [vmem:[#allocation7 + $0x3c] sm:$0xf]
        %v344 = vld [vmem:[#allocation7 + $0x40] sm:$0xf]
        %v345 = vld [vmem:[#allocation7 + $0x44] sm:$0xf]
        %v346 = vld [vmem:[#allocation7 + $0x48] sm:$0xf]
        %v347 = vld [vmem:[#allocation7 + $0x4c] sm:$0xf]
        %v348 = vld [vmem:[#allocation7 + $0x50] sm:$0xf]
        %v349 = vld [vmem:[#allocation7 + $0x54] sm:$0xf]
        %v350 = vld [vmem:[#allocation7 + $0x58] sm:$0xf]
        %v351 = vld [vmem:[#allocation7 + $0x5c] sm:$0xf]
        %v352 = vld [vmem:[#allocation7 + $0x60] sm:$0xf]
        %v353 = vld [vmem:[#allocation7 + $0x64] sm:$0xf]
        %v354 = vld [vmem:[#allocation7 + $0x68] sm:$0xf]
        %v355 = vld [vmem:[#allocation7 + $0x6c] sm:$0xf]
        %v356 = vld [vmem:[#allocation7 + $0x70] sm:$0xf]
        %v357 = vld [vmem:[#allocation7 + $0x74] sm:$0xf]
        %v358 = vld [vmem:[#allocation7 + $0x78] sm:$0xf]
        %v359 = vld [vmem:[#allocation7 + $0x7c] sm:$0xf]
        %v360 = vld [vmem:[#allocation7 + $0x80] sm:$0xf]
        %v361 = vld [vmem:[#allocation7 + $0x84] sm:$0xf]
        %v362 = vld [vmem:[#allocation7 + $0x88] sm:$0xf]
        %v363 = vld [vmem:[#allocation7 + $0x8c] sm:$0xf]
        %v364 = vld [vmem:[#allocation7 + $0x90] sm:$0xf]
        %v365 = vld [vmem:[#allocation7 + $0x94] sm:$0xf]
        %v366 = vld [vmem:[#allocation7 + $0x98] sm:$0xf]
        %v367 = vld [vmem:[#allocation7 + $0x9c] sm:$0xf]
        %v368 = vld [vmem:[#allocation7 + $0xa0] sm:$0xf]
        %v369 = vld [vmem:[#allocation7 + $0xa4] sm:$0xf]
        %v370 = vld [vmem:[#allocation7 + $0xa8] sm:$0xf]
        %v371 = vld [vmem:[#allocation7 + $0xac] sm:$0xf]
        %v372 = vld [vmem:[#allocation7 + $0xb0] sm:$0xf]
        %v373 = vld [vmem:[#allocation7 + $0xb4] sm:$0xf]
        %v374 = vld [vmem:[#allocation7 + $0xb8] sm:$0xf]
        %v375 = vld [vmem:[#allocation7 + $0xbc] sm:$0xf]
        %v376 = vld [vmem:[#allocation10] sm:$0x1]
        %v377 = vperm.slane %v376, 0
        %v390 = vunpack.c.l.b16 %v316
        %v391 = vunpack.c.h.b16 %v316
        %v392 = vunpack.c.l.b16 %v317
        %v393 = vunpack.c.l.b16 %v318
        %v394 = vunpack.c.h.b16 %v318
        %v395 = vunpack.c.l.b16 %v319
        %v396 = vunpack.c.l.b16 %v320
        %v397 = vunpack.c.h.b16 %v320
        %v398 = vunpack.c.l.b16 %v321
        %v399 = vunpack.c.l.b16 %v322
        %v400 = vunpack.c.h.b16 %v322
        %v401 = vunpack.c.l.b16 %v323
        %v402 = vunpack.c.l.b16 %v324
        %v403 = vunpack.c.h.b16 %v324
        %v404 = vunpack.c.l.b16 %v325
        %v405 = vunpack.c.l.b16 %v326
        %v406 = vunpack.c.h.b16 %v326
        %v407 = vunpack.c.l.b16 %v327
        %v408 = vpack.c.b16 %v393, %v390
        %v409 = vpack.c.b16 %v394, %v391
        %v410 = vpack.c.b16 %v395, %v392
        %v411 = vpack.c.b16 %v399, %v396
        %v412 = vpack.c.b16 %v400, %v397
        %v413 = vpack.c.b16 %v401, %v398
        %v414 = vpack.c.b16 %v405, %v402
        %v415 = vpack.c.b16 %v406, %v403
        %v416 = vpack.c.b16 %v407, %v404
        %v474 = vunpack.c.l.b16 %v328
        %v475 = vunpack.c.l.b16 %v329
        %v476 = vunpack.c.l.b16 %v330
        %v477 = vunpack.c.l.b16 %v331
        %v478 = vunpack.c.l.b16 %v332
        %v479 = vunpack.c.l.b16 %v333
        %v480 = vunpack.c.l.b16 %v334
        %v481 = vunpack.c.l.b16 %v335
        %v482 = vunpack.c.l.b16 %v336
        %v483 = vunpack.c.l.b16 %v337
        %v484 = vunpack.c.l.b16 %v338
        %v485 = vunpack.c.l.b16 %v339
        %v486 = vunpack.c.l.b16 %v340
        %v487 = vunpack.c.l.b16 %v341
        %v488 = vunpack.c.l.b16 %v342
        %v489 = vunpack.c.l.b16 %v343
        %v490 = vunpack.c.l.b16 %v344
        %v491 = vunpack.c.l.b16 %v345
        %v492 = vunpack.c.l.b16 %v346
        %v493 = vunpack.c.l.b16 %v347
        %v494 = vunpack.c.l.b16 %v348
        %v495 = vunpack.c.l.b16 %v349
        %v496 = vunpack.c.l.b16 %v350
        %v497 = vunpack.c.l.b16 %v351
        %v498 = vunpack.c.l.b16 %v352
        %v499 = vunpack.c.l.b16 %v353
        %v500 = vunpack.c.l.b16 %v354
        %v501 = vunpack.c.l.b16 %v355
        %v502 = vunpack.c.l.b16 %v356
        %v503 = vunpack.c.l.b16 %v357
        %v504 = vunpack.c.l.b16 %v358
        %v505 = vunpack.c.l.b16 %v359
        %v506 = vunpack.c.l.b16 %v360
        %v507 = vunpack.c.l.b16 %v361
        %v508 = vunpack.c.l.b16 %v362
        %v509 = vunpack.c.l.b16 %v363
        %v510 = vunpack.c.l.b16 %v364
        %v511 = vunpack.c.l.b16 %v365
        %v512 = vunpack.c.l.b16 %v366
        %v513 = vunpack.c.l.b16 %v367
        %v514 = vunpack.c.l.b16 %v368
        %v515 = vunpack.c.l.b16 %v369
        %v516 = vunpack.c.l.b16 %v370
        %v517 = vunpack.c.l.b16 %v371
        %v518 = vunpack.c.l.b16 %v372
        %v519 = vunpack.c.l.b16 %v373
        %v520 = vunpack.c.l.b16 %v374
        %v521 = vunpack.c.l.b16 %v375
        %v522 = vpack.c.b16 %v475, %v474
        %v523 = vpack.c.b16 %v477, %v476
        %v524 = vpack.c.b16 %v479, %v478
        %v525 = vpack.c.b16 %v481, %v480
        %v526 = vpack.c.b16 %v483, %v482
        %v527 = vpack.c.b16 %v485, %v484
        %v528 = vpack.c.b16 %v487, %v486
        %v529 = vpack.c.b16 %v489, %v488
        %v530 = vpack.c.b16 %v491, %v490
        %v531 = vpack.c.b16 %v493, %v492
        %v532 = vpack.c.b16 %v495, %v494
        %v533 = vpack.c.b16 %v497, %v496
        %v534 = vpack.c.b16 %v499, %v498
        %v535 = vpack.c.b16 %v501, %v500
        %v536 = vpack.c.b16 %v503, %v502
        %v537 = vpack.c.b16 %v505, %v504
        %v538 = vpack.c.b16 %v507, %v506
        %v539 = vpack.c.b16 %v509, %v508
        %v540 = vpack.c.b16 %v511, %v510
        %v541 = vpack.c.b16 %v513, %v512
        %v542 = vpack.c.b16 %v515, %v514
        %v543 = vpack.c.b16 %v517, %v516
        %v544 = vpack.c.b16 %v519, %v518
        %v545 = vpack.c.b16 %v521, %v520
        %570 = vmatpush.bf16.msra.mxu0 %v529
        %571 = vmatpush.bf16.msra.mxu0 %v528
        %572 = vmatpush.bf16.msra.mxu0 %v527
        %573 = vmatpush.bf16.msra.mxu0 %v526
        %574 = vmatpush.bf16.msra.mxu0 %v525
        %575 = vmatpush.bf16.msra.mxu0 %v524
        %576 = vmatpush.bf16.msra.mxu0 %v523
        %577 = vmatpush.bf16.msra.mxu0 %v522
        %578 = vmatmul.bf16.gmra.mxu0 %v408
        %v579 = vpop.f32.mrf.mxu0
        %v580 = vadd.f32 %v377, %v579
        %v581 = vpop.f32.mrf.mxu0
        %v582 = vadd.f32 %v377, %v581
        %583 = vmatmul.bf16.gmra.mxu0 %v411
        %v584 = vpop.f32.mrf.mxu0
        %v585 = vadd.f32 %v377, %v584
        %v586 = vpop.f32.mrf.mxu0
        %v587 = vadd.f32 %v377, %v586
        %588 = vmatmul.bf16.gmra.mxu0 %v414
        %v589 = vpop.f32.mrf.mxu0
        %v590 = vadd.f32 %v377, %v589
        %v591 = vpop.f32.mrf.mxu0
        %v592 = vadd.f32 %v377, %v591
        %593 = vdwg.mxu0
        %594 = vmatpush.bf16.msra.mxu0 %v537
        %595 = vmatpush.bf16.msra.mxu0 %v536
        %596 = vmatpush.bf16.msra.mxu0 %v535
        %597 = vmatpush.bf16.msra.mxu0 %v534
        %598 = vmatpush.bf16.msra.mxu0 %v533
        %599 = vmatpush.bf16.msra.mxu0 %v532
        %600 = vmatpush.bf16.msra.mxu0 %v531
        %601 = vmatpush.bf16.msra.mxu0 %v530
        %602 = vmatmul.bf16.gmra.mxu0 %v409
        %v603 = vpop.f32.mrf.mxu0
        %v604 = vadd.f32 %v580, %v603
        %v605 = vpop.f32.mrf.mxu0
        %v606 = vadd.f32 %v582, %v605
        %607 = vmatmul.bf16.gmra.mxu0 %v412
        %v608 = vpop.f32.mrf.mxu0
        %v609 = vadd.f32 %v585, %v608
        %v610 = vpop.f32.mrf.mxu0
        %v611 = vadd.f32 %v587, %v610
        %612 = vmatmul.bf16.gmra.mxu0 %v415
        %v613 = vpop.f32.mrf.mxu0
        %v614 = vadd.f32 %v590, %v613
        %v615 = vpop.f32.mrf.mxu0
        %v616 = vadd.f32 %v592, %v615
        %617 = vdwg.mxu0
        %618 = vmatpush.bf16.msra.mxu0 %v545
        %619 = vmatpush.bf16.msra.mxu0 %v544
        %620 = vmatpush.bf16.msra.mxu0 %v543
        %621 = vmatpush.bf16.msra.mxu0 %v542
        %622 = vmatpush.bf16.msra.mxu0 %v541
        %623 = vmatpush.bf16.msra.mxu0 %v540
        %624 = vmatpush.bf16.msra.mxu0 %v539
        %625 = vmatpush.bf16.msra.mxu0 %v538
        %626 = vmatmul.bf16.gmra.mxu0 %v410
        %v627 = vpop.f32.mrf.mxu0
        %v628 = vadd.f32 %v604, %v627
        %v629 = vpop.f32.mrf.mxu0
        %v630 = vadd.f32 %v606, %v629
        %631 = vmatmul.bf16.gmra.mxu0 %v413
        %v632 = vpop.f32.mrf.mxu0
        %v633 = vadd.f32 %v609, %v632
        %v634 = vpop.f32.mrf.mxu0
        %v635 = vadd.f32 %v611, %v634
        %636 = vmatmul.bf16.gmra.mxu0 %v416
        %v637 = vpop.f32.mrf.mxu0
        %v638 = vadd.f32 %v614, %v637
        %v639 = vpop.f32.mrf.mxu0
        %v640 = vadd.f32 %v616, %v639
        %641 = vdwg.mxu0
        %v642 = vmul.f32 %v628, 0.2
        %v643 = vmul.f32 %v630, 0.2
        %v644 = vmul.f32 %v633, 0.2
        %v645 = vmul.f32 %v635, 0.2
        %v646 = vmul.f32 %v638, 0.2
        %v647 = vmul.f32 %v640, 0.2
        %v648 = vmax.f32 %v628, %v642
        %v649 = vmax.f32 %v630, %v643
        %v650 = vmax.f32 %v633, %v644
        %v651 = vmax.f32 %v635, %v645
        %v652 = vmax.f32 %v638, %v646
        %v653 = vmax.f32 %v640, %v647
        %v654 = vpack.c.bf16 %v648, %v648
        %v655 = vpack.c.bf16 %v649, %v649
        %v656 = vpack.c.bf16 %v650, %v650
        %v657 = vpack.c.bf16 %v651, %v651
        %v658 = vpack.c.bf16 %v652, %v652
        %v659 = vpack.c.bf16 %v653, %v653
        %660 = vst [vmem:[#allocation5] sm:$0xf] %v654
        %661 = vst [vmem:[#allocation5 + $0xc] sm:$0xf] %v655
        %662 = vst [vmem:[#allocation5 + $0x18] sm:$0xf] %v656
        %663 = vst [vmem:[#allocation5 + $0x24] sm:$0xf] %v657
        %664 = vst [vmem:[#allocation5 + $0x30] sm:$0xf] %v658
        %665 = vst [vmem:[#allocation5 + $0x3c] sm:$0xf] %v659
        %v666 = vpack.c.bf16 %v194, %v194
        %v667 = vpack.c.bf16 %v195, %v195
        %v668 = vpack.c.bf16 %v196, %v196
        %v669 = vpack.c.bf16 %v197, %v197
        %v670 = vpack.c.bf16 %v198, %v198
        %v671 = vpack.c.bf16 %v199, %v199
        %672 = vst [vmem:[#allocation5 + $0x4] sm:$0xf] %v666
        %673 = vst [vmem:[#allocation5 + $0x10] sm:$0xf] %v667
        %674 = vst [vmem:[#allocation5 + $0x1c] sm:$0xf] %v668
        %675 = vst [vmem:[#allocation5 + $0x28] sm:$0xf] %v669
        %676 = vst [vmem:[#allocation5 + $0x34] sm:$0xf] %v670
        %677 = vst [vmem:[#allocation5 + $0x40] sm:$0xf] %v671
        %v678 = vld [vmem:[#allocation5] sm:$0xff]
        %v679 = vld [vmem:[#allocation5 + $0xc] sm:$0xff]
        %v680 = vld [vmem:[#allocation5 + $0x18] sm:$0xff]
        %v681 = vld [vmem:[#allocation5 + $0x24] sm:$0xff]
        %v682 = vld [vmem:[#allocation5 + $0x30] sm:$0xff]
        %v683 = vld [vmem:[#allocation5 + $0x3c] sm:$0xff]
        %v684 = vld [vmem:[#allocation7 + $0xc0] sm:$0xf]
        %v685 = vld [vmem:[#allocation7 + $0xc4] sm:$0xf]
        %v686 = vld [vmem:[#allocation7 + $0xc8] sm:$0xf]
        %v687 = vld [vmem:[#allocation7 + $0xcc] sm:$0xf]
        %v688 = vld [vmem:[#allocation7 + $0xd0] sm:$0xf]
        %v689 = vld [vmem:[#allocation7 + $0xd4] sm:$0xf]
        %v690 = vld [vmem:[#allocation7 + $0xd8] sm:$0xf]
        %v691 = vld [vmem:[#allocation7 + $0xdc] sm:$0xf]
        %v692 = vld [vmem:[#allocation7 + $0xe0] sm:$0xf]
        %v693 = vld [vmem:[#allocation7 + $0xe4] sm:$0xf]
        %v694 = vld [vmem:[#allocation7 + $0xe8] sm:$0xf]
        %v695 = vld [vmem:[#allocation7 + $0xec] sm:$0xf]
        %v696 = vld [vmem:[#allocation7 + $0xf0] sm:$0xf]
        %v697 = vld [vmem:[#allocation7 + $0xf4] sm:$0xf]
        %v698 = vld [vmem:[#allocation7 + $0xf8] sm:$0xf]
        %v699 = vld [vmem:[#allocation7 + $0xfc] sm:$0xf]
        %v700 = vld [vmem:[#allocation7 + $0x100] sm:$0xf]
        %v701 = vld [vmem:[#allocation7 + $0x104] sm:$0xf]
        %v702 = vld [vmem:[#allocation7 + $0x108] sm:$0xf]
        %v703 = vld [vmem:[#allocation7 + $0x10c] sm:$0xf]
        %v704 = vld [vmem:[#allocation7 + $0x110] sm:$0xf]
        %v705 = vld [vmem:[#allocation7 + $0x114] sm:$0xf]
        %v706 = vld [vmem:[#allocation7 + $0x118] sm:$0xf]
        %v707 = vld [vmem:[#allocation7 + $0x11c] sm:$0xf]
        %v708 = vld [vmem:[#allocation7 + $0x120] sm:$0xf]
        %v709 = vld [vmem:[#allocation7 + $0x124] sm:$0xf]
        %v710 = vld [vmem:[#allocation7 + $0x128] sm:$0xf]
        %v711 = vld [vmem:[#allocation7 + $0x12c] sm:$0xf]
        %v712 = vld [vmem:[#allocation7 + $0x130] sm:$0xf]
        %v713 = vld [vmem:[#allocation7 + $0x134] sm:$0xf]
        %v714 = vld [vmem:[#allocation7 + $0x138] sm:$0xf]
        %v715 = vld [vmem:[#allocation7 + $0x13c] sm:$0xf]
        %v716 = vld [vmem:[#allocation10 + $0x1] sm:$0x1]
        %v717 = vperm.slane %v716, 0
        %v724 = vunpack.c.l.b16 %v678
        %v725 = vunpack.c.h.b16 %v678
        %v726 = vunpack.c.l.b16 %v679
        %v727 = vunpack.c.h.b16 %v679
        %v728 = vunpack.c.l.b16 %v680
        %v729 = vunpack.c.h.b16 %v680
        %v730 = vunpack.c.l.b16 %v681
        %v731 = vunpack.c.h.b16 %v681
        %v732 = vunpack.c.l.b16 %v682
        %v733 = vunpack.c.h.b16 %v682
        %v734 = vunpack.c.l.b16 %v683
        %v735 = vunpack.c.h.b16 %v683
        %v736 = vpack.c.b16 %v726, %v724
        %v737 = vpack.c.b16 %v727, %v725
        %v738 = vpack.c.b16 %v730, %v728
        %v739 = vpack.c.b16 %v731, %v729
        %v740 = vpack.c.b16 %v734, %v732
        %v741 = vpack.c.b16 %v735, %v733
        %v780 = vunpack.c.l.b16 %v684
        %v781 = vunpack.c.l.b16 %v685
        %v782 = vunpack.c.l.b16 %v686
        %v783 = vunpack.c.l.b16 %v687
        %v784 = vunpack.c.l.b16 %v688
        %v785 = vunpack.c.l.b16 %v689
        %v786 = vunpack.c.l.b16 %v690
        %v787 = vunpack.c.l.b16 %v691
        %v788 = vunpack.c.l.b16 %v692
        %v789 = vunpack.c.l.b16 %v693
        %v790 = vunpack.c.l.b16 %v694
        %v791 = vunpack.c.l.b16 %v695
        %v792 = vunpack.c.l.b16 %v696
        %v793 = vunpack.c.l.b16 %v697
        %v794 = vunpack.c.l.b16 %v698
        %v795 = vunpack.c.l.b16 %v699
        %v796 = vunpack.c.l.b16 %v700
        %v797 = vunpack.c.l.b16 %v701
        %v798 = vunpack.c.l.b16 %v702
        %v799 = vunpack.c.l.b16 %v703
        %v800 = vunpack.c.l.b16 %v704
        %v801 = vunpack.c.l.b16 %v705
        %v802 = vunpack.c.l.b16 %v706
        %v803 = vunpack.c.l.b16 %v707
        %v804 = vunpack.c.l.b16 %v708
        %v805 = vunpack.c.l.b16 %v709
        %v806 = vunpack.c.l.b16 %v710
        %v807 = vunpack.c.l.b16 %v711
        %v808 = vunpack.c.l.b16 %v712
        %v809 = vunpack.c.l.b16 %v713
        %v810 = vunpack.c.l.b16 %v714
        %v811 = vunpack.c.l.b16 %v715
        %v812 = vpack.c.b16 %v781, %v780
        %v813 = vpack.c.b16 %v783, %v782
        %v814 = vpack.c.b16 %v785, %v784
        %v815 = vpack.c.b16 %v787, %v786
        %v816 = vpack.c.b16 %v789, %v788
        %v817 = vpack.c.b16 %v791, %v790
        %v818 = vpack.c.b16 %v793, %v792
        %v819 = vpack.c.b16 %v795, %v794
        %v820 = vpack.c.b16 %v797, %v796
        %v821 = vpack.c.b16 %v799, %v798
        %v822 = vpack.c.b16 %v801, %v800
        %v823 = vpack.c.b16 %v803, %v802
        %v824 = vpack.c.b16 %v805, %v804
        %v825 = vpack.c.b16 %v807, %v806
        %v826 = vpack.c.b16 %v809, %v808
        %v827 = vpack.c.b16 %v811, %v810
        %844 = vmatpush.bf16.msra.mxu0 %v819
        %845 = vmatpush.bf16.msra.mxu0 %v818
        %846 = vmatpush.bf16.msra.mxu0 %v817
        %847 = vmatpush.bf16.msra.mxu0 %v816
        %848 = vmatpush.bf16.msra.mxu0 %v815
        %849 = vmatpush.bf16.msra.mxu0 %v814
        %850 = vmatpush.bf16.msra.mxu0 %v813
        %851 = vmatpush.bf16.msra.mxu0 %v812
        %852 = vmatmul.bf16.gmra.mxu0 %v736
        %v853 = vpop.f32.mrf.mxu0
        %v854 = vadd.f32 %v717, %v853
        %v855 = vpop.f32.mrf.mxu0
        %v856 = vadd.f32 %v717, %v855
        %857 = vmatmul.bf16.gmra.mxu0 %v738
        %v858 = vpop.f32.mrf.mxu0
        %v859 = vadd.f32 %v717, %v858
        %v860 = vpop.f32.mrf.mxu0
        %v861 = vadd.f32 %v717, %v860
        %862 = vmatmul.bf16.gmra.mxu0 %v740
        %v863 = vpop.f32.mrf.mxu0
        %v864 = vadd.f32 %v717, %v863
        %v865 = vpop.f32.mrf.mxu0
        %v866 = vadd.f32 %v717, %v865
        %867 = vdwg.mxu0
        %868 = vmatpush.bf16.msra.mxu0 %v827
        %869 = vmatpush.bf16.msra.mxu0 %v826
        %870 = vmatpush.bf16.msra.mxu0 %v825
        %871 = vmatpush.bf16.msra.mxu0 %v824
        %872 = vmatpush.bf16.msra.mxu0 %v823
        %873 = vmatpush.bf16.msra.mxu0 %v822
        %874 = vmatpush.bf16.msra.mxu0 %v821
        %875 = vmatpush.bf16.msra.mxu0 %v820
        %876 = vmatmul.bf16.gmra.mxu0 %v737
        %v877 = vpop.f32.mrf.mxu0
        %v878 = vadd.f32 %v854, %v877
        %v879 = vpop.f32.mrf.mxu0
        %v880 = vadd.f32 %v856, %v879
        %881 = vmatmul.bf16.gmra.mxu0 %v739
        %v882 = vpop.f32.mrf.mxu0
        %v883 = vadd.f32 %v859, %v882
        %v884 = vpop.f32.mrf.mxu0
        %v885 = vadd.f32 %v861, %v884
        %886 = vmatmul.bf16.gmra.mxu0 %v741
        %v887 = vpop.f32.mrf.mxu0
        %v888 = vadd.f32 %v864, %v887
        %v889 = vpop.f32.mrf.mxu0
        %v890 = vadd.f32 %v866, %v889
        %891 = vdwg.mxu0
        %v892 = vmul.f32 %v878, 0.2
        %v893 = vmul.f32 %v880, 0.2
        %v894 = vmul.f32 %v883, 0.2
        %v895 = vmul.f32 %v885, 0.2
        %v896 = vmul.f32 %v888, 0.2
        %v897 = vmul.f32 %v890, 0.2
        %v898 = vmax.f32 %v878, %v892
        %v899 = vmax.f32 %v880, %v893
        %v900 = vmax.f32 %v883, %v894
        %v901 = vmax.f32 %v885, %v895
        %v902 = vmax.f32 %v888, %v896
        %v903 = vmax.f32 %v890, %v897
        %v904 = vrot.slane %v898, 5
        %v905 = vrot.slane %v899, 5
        %v906 = vrot.slane %v900, 5
        %v907 = vrot.slane %v901, 5
        %v908 = vrot.slane %v902, 5
        %v909 = vrot.slane %v903, 5
        %vm910 = vcmp.lt.s32.totalorder %v219, 3
        %v911 = vsel %vm910, %v908, %v909
        %v912 = vsel %vm910, %v907, %v908
        %v913 = vsel %vm910, %v906, %v907
        %v914 = vsel %vm910, %v905, %v906
        %v915 = vsel %vm910, %v904, %v905
        %v916 = vsel %vm910, %v909, %v904
        %917 = vst [vmem:[#allocation3] sm:$0xff] %v916
        %918 = vst [vmem:[#allocation3 + $0x8] sm:$0xff] %v915
        %919 = vst [vmem:[#allocation3 + $0x10] sm:$0xff] %v914
        %920 = vst [vmem:[#allocation3 + $0x18] sm:$0xff] %v913
        %921 = vst [vmem:[#allocation3 + $0x20] sm:$0xff] %v912
        %922 = vst [vmem:[#allocation3 + $0x28] sm:$0xff] %v911
        %v923 = vrot.slane %v898, 3
        %v924 = vrot.slane %v899, 3
        %v925 = vrot.slane %v900, 3
        %v926 = vrot.slane %v901, 3
        %v927 = vrot.slane %v902, 3
        %v928 = vrot.slane %v903, 3
        %vm929 = vcmp.lt.s32.totalorder %v219, 5
        %v930 = vsel %vm929, %v927, %v928
        %v931 = vsel %vm929, %v926, %v927
        %v932 = vsel %vm929, %v925, %v926
        %v933 = vsel %vm929, %v924, %v925
        %v934 = vsel %vm929, %v923, %v924
        %v935 = vsel %vm929, %v928, %v923
        %936 = vst [vmem:[#allocation4] sm:$0xff] %v934
        %937 = vst [vmem:[#allocation4 + $0x8] sm:$0xff] %v933
        %938 = vst [vmem:[#allocation4 + $0x10] sm:$0xff] %v932
        %939 = vst [vmem:[#allocation4 + $0x18] sm:$0xff] %v931
        %940 = vst [vmem:[#allocation4 + $0x20] sm:$0xff] %v930
        %941 = vst [vmem:[#allocation4 + $0x28] sm:$0xff] %v935
        %v943 = vrot.slane %v900, 3
        %v945 = vrot.slane %v900, 1
        %v947 = vrot.slane %v900, 7
        %vm949 = vcmask 1040384
        %v950 = vsel %vm949, %v943, %v945
        %vm951 = vcmask 1041408
        %v952 = vsel %vm951, %v950, %v947
        %v954 = vrot.slane %v899, 5
        %v956 = vsel %vm254, %v952, %v954
        %957 = vst [vmem:[#allocation3 + $0x10] sm:$0x7] %v956
        %v959 = vrot.slane %v901, 6
        %v961 = vrot.slane %v901, 4
        %v963 = vrot.slane %v901, 2
        %v965 = vsel %vm949, %v959, %v961
        %v966 = vsel %vm951, %v965, %v963
        %v967 = vsel %vm262, %v966, %v902
        %968 = vst [vmem:[#allocation4 + $0x1d] sm:$0x7] %v967
        %v969 = vld [vmem:[#allocation3] sm:$0xff]
        %v970 = vld [vmem:[#allocation3 + $0x8] sm:$0xff]
        %v971 = vld [vmem:[#allocation3 + $0x10] sm:$0xff]
        %v972 = vld [vmem:[#allocation3 + $0x18] sm:$0xff]
        %v973 = vld [vmem:[#allocation3 + $0x20] sm:$0xff]
        %v974 = vld [vmem:[#allocation3 + $0x28] sm:$0xff]
        %v975 = vpack.c.bf16 %v969, %v969
        %v976 = vpack.c.bf16 %v970, %v970
        %v977 = vpack.c.bf16 %v971, %v971
        %v978 = vpack.c.bf16 %v972, %v972
        %v979 = vpack.c.bf16 %v973, %v973
        %v980 = vpack.c.bf16 %v974, %v974
        %981 = vst [vmem:[#allocation5] sm:$0xf] %v975
        %982 = vst [vmem:[#allocation5 + $0xc] sm:$0xf] %v976
        %983 = vst [vmem:[#allocation5 + $0x18] sm:$0xf] %v977
        %984 = vst [vmem:[#allocation5 + $0x24] sm:$0xf] %v978
        %985 = vst [vmem:[#allocation5 + $0x30] sm:$0xf] %v979
        %986 = vst [vmem:[#allocation5 + $0x3c] sm:$0xf] %v980
        %v987 = vpack.c.bf16 %v898, %v898
        %v988 = vpack.c.bf16 %v899, %v899
        %v989 = vpack.c.bf16 %v900, %v900
        %v990 = vpack.c.bf16 %v901, %v901
        %v991 = vpack.c.bf16 %v902, %v902
        %v992 = vpack.c.bf16 %v903, %v903
        %993 = vst [vmem:[#allocation5 + $0x4] sm:$0xf] %v987
        %994 = vst [vmem:[#allocation5 + $0x10] sm:$0xf] %v988
        %995 = vst [vmem:[#allocation5 + $0x1c] sm:$0xf] %v989
        %996 = vst [vmem:[#allocation5 + $0x28] sm:$0xf] %v990
        %997 = vst [vmem:[#allocation5 + $0x34] sm:$0xf] %v991
        %998 = vst [vmem:[#allocation5 + $0x40] sm:$0xf] %v992
        %v999 = vld [vmem:[#allocation4] sm:$0xff]
        %v1000 = vld [vmem:[#allocation4 + $0x8] sm:$0xff]
        %v1001 = vld [vmem:[#allocation4 + $0x10] sm:$0xff]
        %v1002 = vld [vmem:[#allocation4 + $0x18] sm:$0xff]
        %v1003 = vld [vmem:[#allocation4 + $0x20] sm:$0xff]
        %v1004 = vld [vmem:[#allocation4 + $0x28] sm:$0xff]
        %v1005 = vpack.c.bf16 %v999, %v999
        %v1006 = vpack.c.bf16 %v1000, %v1000
        %v1007 = vpack.c.bf16 %v1001, %v1001
        %v1008 = vpack.c.bf16 %v1002, %v1002
        %v1009 = vpack.c.bf16 %v1003, %v1003
        %v1010 = vpack.c.bf16 %v1004, %v1004
        %1011 = vst [vmem:[#allocation5 + $0x8] sm:$0xf] %v1005
        %1012 = vst [vmem:[#allocation5 + $0x14] sm:$0xf] %v1006
        %1013 = vst [vmem:[#allocation5 + $0x20] sm:$0xf] %v1007
        %1014 = vst [vmem:[#allocation5 + $0x2c] sm:$0xf] %v1008
        %1015 = vst [vmem:[#allocation5 + $0x38] sm:$0xf] %v1009
        %1016 = vst [vmem:[#allocation5 + $0x44] sm:$0xf] %v1010
        %v1017 = vld [vmem:[#allocation5] sm:$0xff]
        %v1018 = vld [vmem:[#allocation5 + $0x8] sm:$0xf]
        %v1019 = vld [vmem:[#allocation5 + $0xc] sm:$0xff]
        %v1020 = vld [vmem:[#allocation5 + $0x14] sm:$0xf]
        %v1021 = vld [vmem:[#allocation5 + $0x18] sm:$0xff]
        %v1022 = vld [vmem:[#allocation5 + $0x20] sm:$0xf]
        %v1023 = vld [vmem:[#allocation5 + $0x24] sm:$0xff]
        %v1024 = vld [vmem:[#allocation5 + $0x2c] sm:$0xf]
        %v1025 = vld [vmem:[#allocation5 + $0x30] sm:$0xff]
        %v1026 = vld [vmem:[#allocation5 + $0x38] sm:$0xf]
        %v1027 = vld [vmem:[#allocation5 + $0x3c] sm:$0xff]
        %v1028 = vld [vmem:[#allocation5 + $0x44] sm:$0xf]
        %s1029 = scalar_lea.vmem [#allocation7], 320
        %v1030 = vld [vmem:[%s1029] sm:$0xf]
        %v1031 = vld [vmem:[%s1029 + $0x4] sm:$0xf]
        %v1032 = vld [vmem:[%s1029 + $0x8] sm:$0xf]
        %v1033 = vld [vmem:[%s1029 + $0xc] sm:$0xf]
        %v1034 = vld [vmem:[%s1029 + $0x10] sm:$0xf]
        %v1035 = vld [vmem:[%s1029 + $0x14] sm:$0xf]
        %v1036 = vld [vmem:[%s1029 + $0x18] sm:$0xf]
        %v1037 = vld [vmem:[%s1029 + $0x1c] sm:$0xf]
        %v1038 = vld [vmem:[%s1029 + $0x20] sm:$0xf]
        %v1039 = vld [vmem:[%s1029 + $0x24] sm:$0xf]
        %v1040 = vld [vmem:[%s1029 + $0x28] sm:$0xf]
        %v1041 = vld [vmem:[%s1029 + $0x2c] sm:$0xf]
        %v1042 = vld [vmem:[%s1029 + $0x30] sm:$0xf]
        %v1043 = vld [vmem:[%s1029 + $0x34] sm:$0xf]
        %v1044 = vld [vmem:[%s1029 + $0x38] sm:$0xf]
        %v1045 = vld [vmem:[%s1029 + $0x3c] sm:$0xf]
        %v1046 = vld [vmem:[%s1029 + $0x40] sm:$0xf]
        %v1047 = vld [vmem:[%s1029 + $0x44] sm:$0xf]
        %v1048 = vld [vmem:[%s1029 + $0x48] sm:$0xf]
        %v1049 = vld [vmem:[%s1029 + $0x4c] sm:$0xf]
        %v1050 = vld [vmem:[%s1029 + $0x50] sm:$0xf]
        %v1051 = vld [vmem:[%s1029 + $0x54] sm:$0xf]
        %v1052 = vld [vmem:[%s1029 + $0x58] sm:$0xf]
        %v1053 = vld [vmem:[%s1029 + $0x5c] sm:$0xf]
        %v1054 = vld [vmem:[%s1029 + $0x60] sm:$0xf]
        %v1055 = vld [vmem:[%s1029 + $0x64] sm:$0xf]
        %v1056 = vld [vmem:[%s1029 + $0x68] sm:$0xf]
        %v1057 = vld [vmem:[%s1029 + $0x6c] sm:$0xf]
        %v1058 = vld [vmem:[%s1029 + $0x70] sm:$0xf]
        %v1059 = vld [vmem:[%s1029 + $0x74] sm:$0xf]
        %v1060 = vld [vmem:[%s1029 + $0x78] sm:$0xf]
        %v1061 = vld [vmem:[%s1029 + $0x7c] sm:$0xf]
        %v1062 = vld [vmem:[%s1029 + $0x80] sm:$0xf]
        %v1063 = vld [vmem:[%s1029 + $0x84] sm:$0xf]
        %v1064 = vld [vmem:[%s1029 + $0x88] sm:$0xf]
        %v1065 = vld [vmem:[%s1029 + $0x8c] sm:$0xf]
        %v1066 = vld [vmem:[%s1029 + $0x90] sm:$0xf]
        %v1067 = vld [vmem:[%s1029 + $0x94] sm:$0xf]
        %v1068 = vld [vmem:[%s1029 + $0x98] sm:$0xf]
        %v1069 = vld [vmem:[%s1029 + $0x9c] sm:$0xf]
        %v1070 = vld [vmem:[%s1029 + $0xa0] sm:$0xf]
        %v1071 = vld [vmem:[%s1029 + $0xa4] sm:$0xf]
        %v1072 = vld [vmem:[%s1029 + $0xa8] sm:$0xf]
        %v1073 = vld [vmem:[%s1029 + $0xac] sm:$0xf]
        %v1074 = vld [vmem:[%s1029 + $0xb0] sm:$0xf]
        %v1075 = vld [vmem:[%s1029 + $0xb4] sm:$0xf]
        %v1076 = vld [vmem:[%s1029 + $0xb8] sm:$0xf]
        %v1077 = vld [vmem:[%s1029 + $0xbc] sm:$0xf]
        %s1078 = scalar_lea.vmem [#allocation10], 2
        %v1079 = vld [vmem:[%s1078] sm:$0x1]
        %v1080 = vperm.slane %v1079, 0
        %v1093 = vunpack.c.l.b16 %v1017
        %v1094 = vunpack.c.h.b16 %v1017
        %v1095 = vunpack.c.l.b16 %v1018
        %v1096 = vunpack.c.l.b16 %v1019
        %v1097 = vunpack.c.h.b16 %v1019
        %v1098 = vunpack.c.l.b16 %v1020
        %v1099 = vunpack.c.l.b16 %v1021
        %v1100 = vunpack.c.h.b16 %v1021
        %v1101 = vunpack.c.l.b16 %v1022
        %v1102 = vunpack.c.l.b16 %v1023
        %v1103 = vunpack.c.h.b16 %v1023
        %v1104 = vunpack.c.l.b16 %v1024
        %v1105 = vunpack.c.l.b16 %v1025
        %v1106 = vunpack.c.h.b16 %v1025
        %v1107 = vunpack.c.l.b16 %v1026
        %v1108 = vunpack.c.l.b16 %v1027
        %v1109 = vunpack.c.h.b16 %v1027
        %v1110 = vunpack.c.l.b16 %v1028
        %v1111 = vpack.c.b16 %v1096, %v1093
        %v1112 = vpack.c.b16 %v1097, %v1094
        %v1113 = vpack.c.b16 %v1098, %v1095
        %v1114 = vpack.c.b16 %v1102, %v1099
        %v1115 = vpack.c.b16 %v1103, %v1100
        %v1116 = vpack.c.b16 %v1104, %v1101
        %v1117 = vpack.c.b16 %v1108, %v1105
        %v1118 = vpack.c.b16 %v1109, %v1106
        %v1119 = vpack.c.b16 %v1110, %v1107
        %v1177 = vunpack.c.l.b16 %v1030
        %v1178 = vunpack.c.l.b16 %v1031
        %v1179 = vunpack.c.l.b16 %v1032
        %v1180 = vunpack.c.l.b16 %v1033
        %v1181 = vunpack.c.l.b16 %v1034
        %v1182 = vunpack.c.l.b16 %v1035
        %v1183 = vunpack.c.l.b16 %v1036
        %v1184 = vunpack.c.l.b16 %v1037
        %v1185 = vunpack.c.l.b16 %v1038
        %v1186 = vunpack.c.l.b16 %v1039
        %v1187 = vunpack.c.l.b16 %v1040
        %v1188 = vunpack.c.l.b16 %v1041
        %v1189 = vunpack.c.l.b16 %v1042
        %v1190 = vunpack.c.l.b16 %v1043
        %v1191 = vunpack.c.l.b16 %v1044
        %v1192 = vunpack.c.l.b16 %v1045
        %v1193 = vunpack.c.l.b16 %v1046
        %v1194 = vunpack.c.l.b16 %v1047
        %v1195 = vunpack.c.l.b16 %v1048
        %v1196 = vunpack.c.l.b16 %v1049
        %v1197 = vunpack.c.l.b16 %v1050
        %v1198 = vunpack.c.l.b16 %v1051
        %v1199 = vunpack.c.l.b16 %v1052
        %v1200 = vunpack.c.l.b16 %v1053
        %v1201 = vunpack.c.l.b16 %v1054
        %v1202 = vunpack.c.l.b16 %v1055
        %v1203 = vunpack.c.l.b16 %v1056
        %v1204 = vunpack.c.l.b16 %v1057
        %v1205 = vunpack.c.l.b16 %v1058
        %v1206 = vunpack.c.l.b16 %v1059
        %v1207 = vunpack.c.l.b16 %v1060
        %v1208 = vunpack.c.l.b16 %v1061
        %v1209 = vunpack.c.l.b16 %v1062
        %v1210 = vunpack.c.l.b16 %v1063
        %v1211 = vunpack.c.l.b16 %v1064
        %v1212 = vunpack.c.l.b16 %v1065
        %v1213 = vunpack.c.l.b16 %v1066
        %v1214 = vunpack.c.l.b16 %v1067
        %v1215 = vunpack.c.l.b16 %v1068
        %v1216 = vunpack.c.l.b16 %v1069
        %v1217 = vunpack.c.l.b16 %v1070
        %v1218 = vunpack.c.l.b16 %v1071
        %v1219 = vunpack.c.l.b16 %v1072
        %v1220 = vunpack.c.l.b16 %v1073
        %v1221 = vunpack.c.l.b16 %v1074
        %v1222 = vunpack.c.l.b16 %v1075
        %v1223 = vunpack.c.l.b16 %v1076
        %v1224 = vunpack.c.l.b16 %v1077
        %v1225 = vpack.c.b16 %v1178, %v1177
        %v1226 = vpack.c.b16 %v1180, %v1179
        %v1227 = vpack.c.b16 %v1182, %v1181
        %v1228 = vpack.c.b16 %v1184, %v1183
        %v1229 = vpack.c.b16 %v1186, %v1185
        %v1230 = vpack.c.b16 %v1188, %v1187
        %v1231 = vpack.c.b16 %v1190, %v1189
        %v1232 = vpack.c.b16 %v1192, %v1191
        %v1233 = vpack.c.b16 %v1194, %v1193
        %v1234 = vpack.c.b16 %v1196, %v1195
        %v1235 = vpack.c.b16 %v1198, %v1197
        %v1236 = vpack.c.b16 %v1200, %v1199
        %v1237 = vpack.c.b16 %v1202, %v1201
        %v1238 = vpack.c.b16 %v1204, %v1203
        %v1239 = vpack.c.b16 %v1206, %v1205
        %v1240 = vpack.c.b16 %v1208, %v1207
        %v1241 = vpack.c.b16 %v1210, %v1209
        %v1242 = vpack.c.b16 %v1212, %v1211
        %v1243 = vpack.c.b16 %v1214, %v1213
        %v1244 = vpack.c.b16 %v1216, %v1215
        %v1245 = vpack.c.b16 %v1218, %v1217
        %v1246 = vpack.c.b16 %v1220, %v1219
        %v1247 = vpack.c.b16 %v1222, %v1221
        %v1248 = vpack.c.b16 %v1224, %v1223
        %1273 = vmatpush.bf16.msra.mxu0 %v1232
        %1274 = vmatpush.bf16.msra.mxu0 %v1231
        %1275 = vmatpush.bf16.msra.mxu0 %v1230
        %1276 = vmatpush.bf16.msra.mxu0 %v1229
        %1277 = vmatpush.bf16.msra.mxu0 %v1228
        %1278 = vmatpush.bf16.msra.mxu0 %v1227
        %1279 = vmatpush.bf16.msra.mxu0 %v1226
        %1280 = vmatpush.bf16.msra.mxu0 %v1225
        %1281 = vmatmul.bf16.gmra.mxu0 %v1111
        %v1282 = vpop.f32.mrf.mxu0
        %v1283 = vadd.f32 %v1080, %v1282
        %v1284 = vpop.f32.mrf.mxu0
        %v1285 = vadd.f32 %v1080, %v1284
        %1286 = vmatmul.bf16.gmra.mxu0 %v1114
        %v1287 = vpop.f32.mrf.mxu0
        %v1288 = vadd.f32 %v1080, %v1287
        %v1289 = vpop.f32.mrf.mxu0
        %v1290 = vadd.f32 %v1080, %v1289
        %1291 = vmatmul.bf16.gmra.mxu0 %v1117
        %v1292 = vpop.f32.mrf.mxu0
        %v1293 = vadd.f32 %v1080, %v1292
        %v1294 = vpop.f32.mrf.mxu0
        %v1295 = vadd.f32 %v1080, %v1294
        %1296 = vdwg.mxu0
        %1297 = vmatpush.bf16.msra.mxu0 %v1240
        %1298 = vmatpush.bf16.msra.mxu0 %v1239
        %1299 = vmatpush.bf16.msra.mxu0 %v1238
        %1300 = vmatpush.bf16.msra.mxu0 %v1237
        %1301 = vmatpush.bf16.msra.mxu0 %v1236
        %1302 = vmatpush.bf16.msra.mxu0 %v1235
        %1303 = vmatpush.bf16.msra.mxu0 %v1234
        %1304 = vmatpush.bf16.msra.mxu0 %v1233
        %1305 = vmatmul.bf16.gmra.mxu0 %v1112
        %v1306 = vpop.f32.mrf.mxu0
        %v1307 = vadd.f32 %v1283, %v1306
        %v1308 = vpop.f32.mrf.mxu0
        %v1309 = vadd.f32 %v1285, %v1308
        %1310 = vmatmul.bf16.gmra.mxu0 %v1115
        %v1311 = vpop.f32.mrf.mxu0
        %v1312 = vadd.f32 %v1288, %v1311
        %v1313 = vpop.f32.mrf.mxu0
        %v1314 = vadd.f32 %v1290, %v1313
        %1315 = vmatmul.bf16.gmra.mxu0 %v1118
        %v1316 = vpop.f32.mrf.mxu0
        %v1317 = vadd.f32 %v1293, %v1316
        %v1318 = vpop.f32.mrf.mxu0
        %v1319 = vadd.f32 %v1295, %v1318
        %1320 = vdwg.mxu0
        %1321 = vmatpush.bf16.msra.mxu0 %v1248
        %1322 = vmatpush.bf16.msra.mxu0 %v1247
        %1323 = vmatpush.bf16.msra.mxu0 %v1246
        %1324 = vmatpush.bf16.msra.mxu0 %v1245
        %1325 = vmatpush.bf16.msra.mxu0 %v1244
        %1326 = vmatpush.bf16.msra.mxu0 %v1243
        %1327 = vmatpush.bf16.msra.mxu0 %v1242
        %1328 = vmatpush.bf16.msra.mxu0 %v1241
        %1329 = vmatmul.bf16.gmra.mxu0 %v1113
        %v1330 = vpop.f32.mrf.mxu0
        %v1331 = vadd.f32 %v1307, %v1330
        %v1332 = vpop.f32.mrf.mxu0
        %v1333 = vadd.f32 %v1309, %v1332
        %1334 = vmatmul.bf16.gmra.mxu0 %v1116
        %v1335 = vpop.f32.mrf.mxu0
        %v1336 = vadd.f32 %v1312, %v1335
        %v1337 = vpop.f32.mrf.mxu0
        %v1338 = vadd.f32 %v1314, %v1337
        %1339 = vmatmul.bf16.gmra.mxu0 %v1119
        %v1340 = vpop.f32.mrf.mxu0
        %v1341 = vadd.f32 %v1317, %v1340
        %v1342 = vpop.f32.mrf.mxu0
        %v1343 = vadd.f32 %v1319, %v1342
        %1344 = vdwg.mxu0
        %v1345 = vmul.f32 %v1331, 0.2
        %v1346 = vmul.f32 %v1333, 0.2
        %v1347 = vmul.f32 %v1336, 0.2
        %v1348 = vmul.f32 %v1338, 0.2
        %v1349 = vmul.f32 %v1341, 0.2
        %v1350 = vmul.f32 %v1343, 0.2
        %v1351 = vmax.f32 %v1331, %v1345
        %v1352 = vmax.f32 %v1333, %v1346
        %v1353 = vmax.f32 %v1336, %v1347
        %v1354 = vmax.f32 %v1338, %v1348
        %v1355 = vmax.f32 %v1341, %v1349
        %v1356 = vmax.f32 %v1343, %v1350
        %v1357 = vpack.c.bf16 %v1351, %v1351
        %v1358 = vpack.c.bf16 %v1352, %v1352
        %v1359 = vpack.c.bf16 %v1353, %v1353
        %v1360 = vpack.c.bf16 %v1354, %v1354
        %v1361 = vpack.c.bf16 %v1355, %v1355
        %v1362 = vpack.c.bf16 %v1356, %v1356
        %1363 = vst [vmem:[#allocation5] sm:$0xf] %v1357
        %1364 = vst [vmem:[#allocation5 + $0xc] sm:$0xf] %v1358
        %1365 = vst [vmem:[#allocation5 + $0x18] sm:$0xf] %v1359
        %1366 = vst [vmem:[#allocation5 + $0x24] sm:$0xf] %v1360
        %1367 = vst [vmem:[#allocation5 + $0x30] sm:$0xf] %v1361
        %1368 = vst [vmem:[#allocation5 + $0x3c] sm:$0xf] %v1362
        %v1369 = vpack.c.bf16 %v878, %v878
        %v1370 = vpack.c.bf16 %v880, %v880
        %v1371 = vpack.c.bf16 %v883, %v883
        %v1372 = vpack.c.bf16 %v885, %v885
        %v1373 = vpack.c.bf16 %v888, %v888
        %v1374 = vpack.c.bf16 %v890, %v890
        %1375 = vst [vmem:[#allocation5 + $0x4] sm:$0xf] %v1369
        %1376 = vst [vmem:[#allocation5 + $0x10] sm:$0xf] %v1370
        %1377 = vst [vmem:[#allocation5 + $0x1c] sm:$0xf] %v1371
        %1378 = vst [vmem:[#allocation5 + $0x28] sm:$0xf] %v1372
        %1379 = vst [vmem:[#allocation5 + $0x34] sm:$0xf] %v1373
        %1380 = vst [vmem:[#allocation5 + $0x40] sm:$0xf] %v1374
        %v1381 = vld [vmem:[#allocation5] sm:$0xff]
        %v1382 = vld [vmem:[#allocation5 + $0xc] sm:$0xff]
        %v1383 = vld [vmem:[#allocation5 + $0x18] sm:$0xff]
        %v1384 = vld [vmem:[#allocation5 + $0x24] sm:$0xff]
        %v1385 = vld [vmem:[#allocation5 + $0x30] sm:$0xff]
        %v1386 = vld [vmem:[#allocation5 + $0x3c] sm:$0xff]
        %v1387 = vld [vmem:[%s1029 + $0xc0] sm:$0xf]
        %v1388 = vld [vmem:[%s1029 + $0xc4] sm:$0xf]
        %v1389 = vld [vmem:[%s1029 + $0xc8] sm:$0xf]
        %v1390 = vld [vmem:[%s1029 + $0xcc] sm:$0xf]
        %v1391 = vld [vmem:[%s1029 + $0xd0] sm:$0xf]
        %v1392 = vld [vmem:[%s1029 + $0xd4] sm:$0xf]
        %v1393 = vld [vmem:[%s1029 + $0xd8] sm:$0xf]
        %v1394 = vld [vmem:[%s1029 + $0xdc] sm:$0xf]
        %v1395 = vld [vmem:[%s1029 + $0xe0] sm:$0xf]
        %v1396 = vld [vmem:[%s1029 + $0xe4] sm:$0xf]
        %v1397 = vld [vmem:[%s1029 + $0xe8] sm:$0xf]
        %v1398 = vld [vmem:[%s1029 + $0xec] sm:$0xf]
        %v1399 = vld [vmem:[%s1029 + $0xf0] sm:$0xf]
        %v1400 = vld [vmem:[%s1029 + $0xf4] sm:$0xf]
        %v1401 = vld [vmem:[%s1029 + $0xf8] sm:$0xf]
        %v1402 = vld [vmem:[%s1029 + $0xfc] sm:$0xf]
        %v1403 = vld [vmem:[%s1029 + $0x100] sm:$0xf]
        %v1404 = vld [vmem:[%s1029 + $0x104] sm:$0xf]
        %v1405 = vld [vmem:[%s1029 + $0x108] sm:$0xf]
        %v1406 = vld [vmem:[%s1029 + $0x10c] sm:$0xf]
        %v1407 = vld [vmem:[%s1029 + $0x110] sm:$0xf]
        %v1408 = vld [vmem:[%s1029 + $0x114] sm:$0xf]
        %v1409 = vld [vmem:[%s1029 + $0x118] sm:$0xf]
        %v1410 = vld [vmem:[%s1029 + $0x11c] sm:$0xf]
        %v1411 = vld [vmem:[%s1029 + $0x120] sm:$0xf]
        %v1412 = vld [vmem:[%s1029 + $0x124] sm:$0xf]
        %v1413 = vld [vmem:[%s1029 + $0x128] sm:$0xf]
        %v1414 = vld [vmem:[%s1029 + $0x12c] sm:$0xf]
        %v1415 = vld [vmem:[%s1029 + $0x130] sm:$0xf]
        %v1416 = vld [vmem:[%s1029 + $0x134] sm:$0xf]
        %v1417 = vld [vmem:[%s1029 + $0x138] sm:$0xf]
        %v1418 = vld [vmem:[%s1029 + $0x13c] sm:$0xf]
        %v1419 = vld [vmem:[%s1078 + $0x1] sm:$0x1]
        %v1420 = vperm.slane %v1419, 0
        %v1427 = vunpack.c.l.b16 %v1381
        %v1428 = vunpack.c.h.b16 %v1381
        %v1429 = vunpack.c.l.b16 %v1382
        %v1430 = vunpack.c.h.b16 %v1382
        %v1431 = vunpack.c.l.b16 %v1383
        %v1432 = vunpack.c.h.b16 %v1383
        %v1433 = vunpack.c.l.b16 %v1384
        %v1434 = vunpack.c.h.b16 %v1384
        %v1435 = vunpack.c.l.b16 %v1385
        %v1436 = vunpack.c.h.b16 %v1385
        %v1437 = vunpack.c.l.b16 %v1386
        %v1438 = vunpack.c.h.b16 %v1386
        %v1439 = vpack.c.b16 %v1429, %v1427
        %v1440 = vpack.c.b16 %v1430, %v1428
        %v1441 = vpack.c.b16 %v1433, %v1431
        %v1442 = vpack.c.b16 %v1434, %v1432
        %v1443 = vpack.c.b16 %v1437, %v1435
        %v1444 = vpack.c.b16 %v1438, %v1436
        %v1483 = vunpack.c.l.b16 %v1387
        %v1484 = vunpack.c.l.b16 %v1388
        %v1485 = vunpack.c.l.b16 %v1389
        %v1486 = vunpack.c.l.b16 %v1390
        %v1487 = vunpack.c.l.b16 %v1391
        %v1488 = vunpack.c.l.b16 %v1392
        %v1489 = vunpack.c.l.b16 %v1393
        %v1490 = vunpack.c.l.b16 %v1394
        %v1491 = vunpack.c.l.b16 %v1395
        %v1492 = vunpack.c.l.b16 %v1396
        %v1493 = vunpack.c.l.b16 %v1397
        %v1494 = vunpack.c.l.b16 %v1398
        %v1495 = vunpack.c.l.b16 %v1399
        %v1496 = vunpack.c.l.b16 %v1400
        %v1497 = vunpack.c.l.b16 %v1401
        %v1498 = vunpack.c.l.b16 %v1402
        %v1499 = vunpack.c.l.b16 %v1403
        %v1500 = vunpack.c.l.b16 %v1404
        %v1501 = vunpack.c.l.b16 %v1405
        %v1502 = vunpack.c.l.b16 %v1406
        %v1503 = vunpack.c.l.b16 %v1407
        %v1504 = vunpack.c.l.b16 %v1408
        %v1505 = vunpack.c.l.b16 %v1409
        %v1506 = vunpack.c.l.b16 %v1410
        %v1507 = vunpack.c.l.b16 %v1411
        %v1508 = vunpack.c.l.b16 %v1412
        %v1509 = vunpack.c.l.b16 %v1413
        %v1510 = vunpack.c.l.b16 %v1414
        %v1511 = vunpack.c.l.b16 %v1415
        %v1512 = vunpack.c.l.b16 %v1416
        %v1513 = vunpack.c.l.b16 %v1417
        %v1514 = vunpack.c.l.b16 %v1418
        %v1515 = vpack.c.b16 %v1484, %v1483
        %v1516 = vpack.c.b16 %v1486, %v1485
        %v1517 = vpack.c.b16 %v1488, %v1487
        %v1518 = vpack.c.b16 %v1490, %v1489
        %v1519 = vpack.c.b16 %v1492, %v1491
        %v1520 = vpack.c.b16 %v1494, %v1493
        %v1521 = vpack.c.b16 %v1496, %v1495
        %v1522 = vpack.c.b16 %v1498, %v1497
        %v1523 = vpack.c.b16 %v1500, %v1499
        %v1524 = vpack.c.b16 %v1502, %v1501
        %v1525 = vpack.c.b16 %v1504, %v1503
        %v1526 = vpack.c.b16 %v1506, %v1505
        %v1527 = vpack.c.b16 %v1508, %v1507
        %v1528 = vpack.c.b16 %v1510, %v1509
        %v1529 = vpack.c.b16 %v1512, %v1511
        %v1530 = vpack.c.b16 %v1514, %v1513
        %1547 = vmatpush.bf16.msra.mxu0 %v1522
        %1548 = vmatpush.bf16.msra.mxu0 %v1521
        %1549 = vmatpush.bf16.msra.mxu0 %v1520
        %1550 = vmatpush.bf16.msra.mxu0 %v1519
        %1551 = vmatpush.bf16.msra.mxu0 %v1518
        %1552 = vmatpush.bf16.msra.mxu0 %v1517
        %1553 = vmatpush.bf16.msra.mxu0 %v1516
        %1554 = vmatpush.bf16.msra.mxu0 %v1515
        %1555 = vmatmul.bf16.gmra.mxu0 %v1439
        %v1556 = vpop.f32.mrf.mxu0
        %v1557 = vadd.f32 %v1420, %v1556
        %v1558 = vpop.f32.mrf.mxu0
        %v1559 = vadd.f32 %v1420, %v1558
        %1560 = vmatmul.bf16.gmra.mxu0 %v1441
        %v1561 = vpop.f32.mrf.mxu0
        %v1562 = vadd.f32 %v1420, %v1561
        %v1563 = vpop.f32.mrf.mxu0
        %v1564 = vadd.f32 %v1420, %v1563
        %1565 = vmatmul.bf16.gmra.mxu0 %v1443
        %v1566 = vpop.f32.mrf.mxu0
        %v1567 = vadd.f32 %v1420, %v1566
        %v1568 = vpop.f32.mrf.mxu0
        %v1569 = vadd.f32 %v1420, %v1568
        %1570 = vdwg.mxu0
        %1571 = vmatpush.bf16.msra.mxu0 %v1530
        %1572 = vmatpush.bf16.msra.mxu0 %v1529
        %1573 = vmatpush.bf16.msra.mxu0 %v1528
        %1574 = vmatpush.bf16.msra.mxu0 %v1527
        %1575 = vmatpush.bf16.msra.mxu0 %v1526
        %1576 = vmatpush.bf16.msra.mxu0 %v1525
        %1577 = vmatpush.bf16.msra.mxu0 %v1524
        %1578 = vmatpush.bf16.msra.mxu0 %v1523
        %1579 = vmatmul.bf16.gmra.mxu0 %v1440
        %v1580 = vpop.f32.mrf.mxu0
        %v1581 = vadd.f32 %v1557, %v1580
        %v1582 = vpop.f32.mrf.mxu0
        %v1583 = vadd.f32 %v1559, %v1582
        %1584 = vmatmul.bf16.gmra.mxu0 %v1442
        %v1585 = vpop.f32.mrf.mxu0
        %v1586 = vadd.f32 %v1562, %v1585
        %v1587 = vpop.f32.mrf.mxu0
        %v1588 = vadd.f32 %v1564, %v1587
        %1589 = vmatmul.bf16.gmra.mxu0 %v1444
        %v1590 = vpop.f32.mrf.mxu0
        %v1591 = vadd.f32 %v1567, %v1590
        %v1592 = vpop.f32.mrf.mxu0
        %v1593 = vadd.f32 %v1569, %v1592
        %1594 = vdwg.mxu0
        %v1595 = vmul.f32 %v1581, 0.2
        %v1596 = vmul.f32 %v1583, 0.2
        %v1597 = vmul.f32 %v1586, 0.2
        %v1598 = vmul.f32 %v1588, 0.2
        %v1599 = vmul.f32 %v1591, 0.2
        %v1600 = vmul.f32 %v1593, 0.2
        %v1601 = vmax.f32 %v1581, %v1595
        %v1602 = vmax.f32 %v1583, %v1596
        %v1603 = vmax.f32 %v1586, %v1597
        %v1604 = vmax.f32 %v1588, %v1598
        %v1605 = vmax.f32 %v1591, %v1599
        %v1606 = vmax.f32 %v1593, %v1600
        %v1607 = vrot.slane %v1601, 7
        %v1608 = vrot.slane %v1602, 7
        %v1609 = vrot.slane %v1603, 7
        %v1610 = vrot.slane %v1604, 7
        %v1611 = vrot.slane %v1605, 7
        %v1612 = vrot.slane %v1606, 7
        %v1613 = vsel %vm220, %v1611, %v1612
        %v1614 = vsel %vm220, %v1610, %v1611
        %v1615 = vsel %vm220, %v1609, %v1610
        %v1616 = vsel %vm220, %v1608, %v1609
        %v1617 = vsel %vm220, %v1607, %v1608
        %v1618 = vsel %vm220, %v1612, %v1607
        %1619 = vst [vmem:[#allocation3] sm:$0xff] %v1613
        %1620 = vst [vmem:[#allocation3 + $0x8] sm:$0xff] %v1618
        %1621 = vst [vmem:[#allocation3 + $0x10] sm:$0xff] %v1617
        %1622 = vst [vmem:[#allocation3 + $0x18] sm:$0xff] %v1616
        %1623 = vst [vmem:[#allocation3 + $0x20] sm:$0xff] %v1615
        %1624 = vst [vmem:[#allocation3 + $0x28] sm:$0xff] %v1614
        %v1625 = vrot.slane %v1601, 1
        %v1626 = vrot.slane %v1602, 1
        %v1627 = vrot.slane %v1603, 1
        %v1628 = vrot.slane %v1604, 1
        %v1629 = vrot.slane %v1605, 1
        %v1630 = vrot.slane %v1606, 1
        %v1631 = vsel %vm239, %v1629, %v1630
        %v1632 = vsel %vm239, %v1628, %v1629
        %v1633 = vsel %vm239, %v1627, %v1628
        %v1634 = vsel %vm239, %v1626, %v1627
        %v1635 = vsel %vm239, %v1625, %v1626
        %v1636 = vsel %vm239, %v1630, %v1625
        %1637 = vst [vmem:[#allocation4] sm:$0xff] %v1634
        %1638 = vst [vmem:[#allocation4 + $0x8] sm:$0xff] %v1633
        %1639 = vst [vmem:[#allocation4 + $0x10] sm:$0xff] %v1632
        %1640 = vst [vmem:[#allocation4 + $0x18] sm:$0xff] %v1631
        %1641 = vst [vmem:[#allocation4 + $0x20] sm:$0xff] %v1636
        %1642 = vst [vmem:[#allocation4 + $0x28] sm:$0xff] %v1635
        %v1644 = vrot.slane %v1604, 1
        %v1646 = vrot.slane %v1604, 7
        %v1649 = vrot.slane %v1603, 5
        %v1651 = vrot.slane %v1603, 3
        %v1653 = vrot.slane %v1603, 1
        %v1655 = vrot.slane %v1603, 7
        %v1657 = vsel %vm949, %v1644, %v1646
        %v1658 = vsel %vm951, %v1657, %v1649
        %vm1659 = vcmask 1042432
        %v1660 = vsel %vm1659, %v1658, %v1651
        %vm1661 = vcmask 1043456
        %v1662 = vsel %vm1661, %v1660, %v1653
        %vm1663 = vcmask 1044480
        %v1664 = vsel %vm1663, %v1662, %v1655
        %vm1665 = vcmask 1045504
        %v1666 = vsel %vm1665, %v1664, %v1649
        %vm1667 = vcmask 1046528
        %v1668 = vsel %vm1667, %v1666, %v1651
        %v1671 = vrot.slane %v1601, 7
        %v1672 = vrot.slane %v1602, 7
        %v1673 = vsel %vm949, %v1671, %v1672
        %v1676 = vsel %vm254, %v1668, %v1673
        %v1677 = vsel %vm254, %v1653, %v1672
        %1678 = vst [vmem:[#allocation3 + $0x10] sm:$0xff] %v1676
        %1679 = vst [vmem:[#allocation3 + $0x18] sm:$0x1] %v1677
        %v1680 = vrot.slane %v1604, 6
        %v1682 = vrot.slane %v1604, 4
        %v1684 = vrot.slane %v1604, 2
        %v1686 = vrot.slane %v1603, 6
        %v1688 = vsel %vm949, %v1680, %v1682
        %v1689 = vsel %vm951, %v1688, %v1684
        %v1690 = vsel %vm1659, %v1689, %v1604
        %v1691 = vsel %vm1661, %v1690, %v1680
        %v1692 = vsel %vm1663, %v1691, %v1682
        %v1693 = vsel %vm1665, %v1692, %v1684
        %v1694 = vsel %vm1667, %v1693, %v1603
        %v1695 = vsel %vm262, %v1694, %v1605
        %v1696 = vsel %vm262, %v1686, %v1606
        %1697 = vst [vmem:[#allocation4 + $0x17] sm:$0xff] %v1695
        %1698 = vst [vmem:[#allocation4 + $0x1f] sm:$0x1] %v1696
        %v1699 = vld [vmem:[#allocation3] sm:$0xff]
        %v1700 = vld [vmem:[#allocation3 + $0x8] sm:$0xff]
        %v1701 = vld [vmem:[#allocation3 + $0x10] sm:$0xff]
        %v1702 = vld [vmem:[#allocation3 + $0x18] sm:$0xff]
        %v1703 = vld [vmem:[#allocation3 + $0x20] sm:$0xff]
        %v1704 = vld [vmem:[#allocation3 + $0x28] sm:$0xff]
        %v1705 = vpack.c.bf16 %v1699, %v1699
        %v1706 = vpack.c.bf16 %v1700, %v1700
        %v1707 = vpack.c.bf16 %v1701, %v1701
        %v1708 = vpack.c.bf16 %v1702, %v1702
        %v1709 = vpack.c.bf16 %v1703, %v1703
        %v1710 = vpack.c.bf16 %v1704, %v1704
        %1711 = vst [vmem:[#allocation5] sm:$0xf] %v1705
        %1712 = vst [vmem:[#allocation5 + $0xc] sm:$0xf] %v1706
        %1713 = vst [vmem:[#allocation5 + $0x18] sm:$0xf] %v1707
        %1714 = vst [vmem:[#allocation5 + $0x24] sm:$0xf] %v1708
        %1715 = vst [vmem:[#allocation5 + $0x30] sm:$0xf] %v1709
        %1716 = vst [vmem:[#allocation5 + $0x3c] sm:$0xf] %v1710
        %v1717 = vpack.c.bf16 %v1601, %v1601
        %v1718 = vpack.c.bf16 %v1602, %v1602
        %v1719 = vpack.c.bf16 %v1603, %v1603
        %v1720 = vpack.c.bf16 %v1604, %v1604
        %v1721 = vpack.c.bf16 %v1605, %v1605
        %v1722 = vpack.c.bf16 %v1606, %v1606
        %1723 = vst [vmem:[#allocation5 + $0x4] sm:$0xf] %v1717
        %1724 = vst [vmem:[#allocation5 + $0x10] sm:$0xf] %v1718
        %1725 = vst [vmem:[#allocation5 + $0x1c] sm:$0xf] %v1719
        %1726 = vst [vmem:[#allocation5 + $0x28] sm:$0xf] %v1720
        %1727 = vst [vmem:[#allocation5 + $0x34] sm:$0xf] %v1721
        %1728 = vst [vmem:[#allocation5 + $0x40] sm:$0xf] %v1722
        %v1729 = vld [vmem:[#allocation4] sm:$0xff]
        %v1730 = vld [vmem:[#allocation4 + $0x8] sm:$0xff]
        %v1731 = vld [vmem:[#allocation4 + $0x10] sm:$0xff]
        %v1732 = vld [vmem:[#allocation4 + $0x18] sm:$0xff]
        %v1733 = vld [vmem:[#allocation4 + $0x20] sm:$0xff]
        %v1734 = vld [vmem:[#allocation4 + $0x28] sm:$0xff]
        %v1735 = vpack.c.bf16 %v1729, %v1729
        %v1736 = vpack.c.bf16 %v1730, %v1730
        %v1737 = vpack.c.bf16 %v1731, %v1731
        %v1738 = vpack.c.bf16 %v1732, %v1732
        %v1739 = vpack.c.bf16 %v1733, %v1733
        %v1740 = vpack.c.bf16 %v1734, %v1734
        %1741 = vst [vmem:[#allocation5 + $0x8] sm:$0xf] %v1735
        %1742 = vst [vmem:[#allocation5 + $0x14] sm:$0xf] %v1736
        %1743 = vst [vmem:[#allocation5 + $0x20] sm:$0xf] %v1737
        %1744 = vst [vmem:[#allocation5 + $0x2c] sm:$0xf] %v1738
        %1745 = vst [vmem:[#allocation5 + $0x38] sm:$0xf] %v1739
        %1746 = vst [vmem:[#allocation5 + $0x44] sm:$0xf] %v1740
        %v1747 = vld [vmem:[#allocation5] sm:$0xff]
        %v1748 = vld [vmem:[#allocation5 + $0x8] sm:$0xf]
        %v1749 = vld [vmem:[#allocation5 + $0xc] sm:$0xff]
        %v1750 = vld [vmem:[#allocation5 + $0x14] sm:$0xf]
        %v1751 = vld [vmem:[#allocation5 + $0x18] sm:$0xff]
        %v1752 = vld [vmem:[#allocation5 + $0x20] sm:$0xf]
        %v1753 = vld [vmem:[#allocation5 + $0x24] sm:$0xff]
        %v1754 = vld [vmem:[#allocation5 + $0x2c] sm:$0xf]
        %v1755 = vld [vmem:[#allocation5 + $0x30] sm:$0xff]
        %v1756 = vld [vmem:[#allocation5 + $0x38] sm:$0xf]
        %v1757 = vld [vmem:[#allocation5 + $0x3c] sm:$0xff]
        %v1758 = vld [vmem:[#allocation5 + $0x44] sm:$0xf]
        %s1759 = scalar_lea.vmem [#allocation7], 640
        %v1760 = vld [vmem:[%s1759] sm:$0xf]
        %v1761 = vld [vmem:[%s1759 + $0x4] sm:$0xf]
        %v1762 = vld [vmem:[%s1759 + $0x8] sm:$0xf]
        %v1763 = vld [vmem:[%s1759 + $0xc] sm:$0xf]
        %v1764 = vld [vmem:[%s1759 + $0x10] sm:$0xf]
        %v1765 = vld [vmem:[%s1759 + $0x14] sm:$0xf]
        %v1766 = vld [vmem:[%s1759 + $0x18] sm:$0xf]
        %v1767 = vld [vmem:[%s1759 + $0x1c] sm:$0xf]
        %v1768 = vld [vmem:[%s1759 + $0x20] sm:$0xf]
        %v1769 = vld [vmem:[%s1759 + $0x24] sm:$0xf]
        %v1770 = vld [vmem:[%s1759 + $0x28] sm:$0xf]
        %v1771 = vld [vmem:[%s1759 + $0x2c] sm:$0xf]
        %v1772 = vld [vmem:[%s1759 + $0x30] sm:$0xf]
        %v1773 = vld [vmem:[%s1759 + $0x34] sm:$0xf]
        %v1774 = vld [vmem:[%s1759 + $0x38] sm:$0xf]
        %v1775 = vld [vmem:[%s1759 + $0x3c] sm:$0xf]
        %v1776 = vld [vmem:[%s1759 + $0x40] sm:$0xf]
        %v1777 = vld [vmem:[%s1759 + $0x44] sm:$0xf]
        %v1778 = vld [vmem:[%s1759 + $0x48] sm:$0xf]
        %v1779 = vld [vmem:[%s1759 + $0x4c] sm:$0xf]
        %v1780 = vld [vmem:[%s1759 + $0x50] sm:$0xf]
        %v1781 = vld [vmem:[%s1759 + $0x54] sm:$0xf]
        %v1782 = vld [vmem:[%s1759 + $0x58] sm:$0xf]
        %v1783 = vld [vmem:[%s1759 + $0x5c] sm:$0xf]
        %v1784 = vld [vmem:[%s1759 + $0x60] sm:$0xf]
        %v1785 = vld [vmem:[%s1759 + $0x64] sm:$0xf]
        %v1786 = vld [vmem:[%s1759 + $0x68] sm:$0xf]
        %v1787 = vld [vmem:[%s1759 + $0x6c] sm:$0xf]
        %v1788 = vld [vmem:[%s1759 + $0x70] sm:$0xf]
        %v1789 = vld [vmem:[%s1759 + $0x74] sm:$0xf]
        %v1790 = vld [vmem:[%s1759 + $0x78] sm:$0xf]
        %v1791 = vld [vmem:[%s1759 + $0x7c] sm:$0xf]
        %v1792 = vld [vmem:[%s1759 + $0x80] sm:$0xf]
        %v1793 = vld [vmem:[%s1759 + $0x84] sm:$0xf]
        %v1794 = vld [vmem:[%s1759 + $0x88] sm:$0xf]
        %v1795 = vld [vmem:[%s1759 + $0x8c] sm:$0xf]
        %v1796 = vld [vmem:[%s1759 + $0x90] sm:$0xf]
        %v1797 = vld [vmem:[%s1759 + $0x94] sm:$0xf]
        %v1798 = vld [vmem:[%s1759 + $0x98] sm:$0xf]
        %v1799 = vld [vmem:[%s1759 + $0x9c] sm:$0xf]
        %v1800 = vld [vmem:[%s1759 + $0xa0] sm:$0xf]
        %v1801 = vld [vmem:[%s1759 + $0xa4] sm:$0xf]
        %v1802 = vld [vmem:[%s1759 + $0xa8] sm:$0xf]
        %v1803 = vld [vmem:[%s1759 + $0xac] sm:$0xf]
        %v1804 = vld [vmem:[%s1759 + $0xb0] sm:$0xf]
        %v1805 = vld [vmem:[%s1759 + $0xb4] sm:$0xf]
        %v1806 = vld [vmem:[%s1759 + $0xb8] sm:$0xf]
        %v1807 = vld [vmem:[%s1759 + $0xbc] sm:$0xf]
        %s1808 = scalar_lea.vmem [#allocation10], 4
        %v1809 = vld [vmem:[%s1808] sm:$0x1]
        %v1810 = vperm.slane %v1809, 0
        %v1823 = vunpack.c.l.b16 %v1747
        %v1824 = vunpack.c.h.b16 %v1747
        %v1825 = vunpack.c.l.b16 %v1748
        %v1826 = vunpack.c.l.b16 %v1749
        %v1827 = vunpack.c.h.b16 %v1749
        %v1828 = vunpack.c.l.b16 %v1750
        %v1829 = vunpack.c.l.b16 %v1751
        %v1830 = vunpack.c.h.b16 %v1751
        %v1831 = vunpack.c.l.b16 %v1752
        %v1832 = vunpack.c.l.b16 %v1753
        %v1833 = vunpack.c.h.b16 %v1753
        %v1834 = vunpack.c.l.b16 %v1754
        %v1835 = vunpack.c.l.b16 %v1755
        %v1836 = vunpack.c.h.b16 %v1755
        %v1837 = vunpack.c.l.b16 %v1756
        %v1838 = vunpack.c.l.b16 %v1757
        %v1839 = vunpack.c.h.b16 %v1757
        %v1840 = vunpack.c.l.b16 %v1758
        %v1841 = vpack.c.b16 %v1826, %v1823
        %v1842 = vpack.c.b16 %v1827, %v1824
        %v1843 = vpack.c.b16 %v1828, %v1825
        %v1844 = vpack.c.b16 %v1832, %v1829
        %v1845 = vpack.c.b16 %v1833, %v1830
        %v1846 = vpack.c.b16 %v1834, %v1831
        %v1847 = vpack.c.b16 %v1838, %v1835
        %v1848 = vpack.c.b16 %v1839, %v1836
        %v1849 = vpack.c.b16 %v1840, %v1837
        %v1907 = vunpack.c.l.b16 %v1760
        %v1908 = vunpack.c.l.b16 %v1761
        %v1909 = vunpack.c.l.b16 %v1762
        %v1910 = vunpack.c.l.b16 %v1763
        %v1911 = vunpack.c.l.b16 %v1764
        %v1912 = vunpack.c.l.b16 %v1765
        %v1913 = vunpack.c.l.b16 %v1766
        %v1914 = vunpack.c.l.b16 %v1767
        %v1915 = vunpack.c.l.b16 %v1768
        %v1916 = vunpack.c.l.b16 %v1769
        %v1917 = vunpack.c.l.b16 %v1770
        %v1918 = vunpack.c.l.b16 %v1771
        %v1919 = vunpack.c.l.b16 %v1772
        %v1920 = vunpack.c.l.b16 %v1773
        %v1921 = vunpack.c.l.b16 %v1774
        %v1922 = vunpack.c.l.b16 %v1775
        %v1923 = vunpack.c.l.b16 %v1776
        %v1924 = vunpack.c.l.b16 %v1777
        %v1925 = vunpack.c.l.b16 %v1778
        %v1926 = vunpack.c.l.b16 %v1779
        %v1927 = vunpack.c.l.b16 %v1780
        %v1928 = vunpack.c.l.b16 %v1781
        %v1929 = vunpack.c.l.b16 %v1782
        %v1930 = vunpack.c.l.b16 %v1783
        %v1931 = vunpack.c.l.b16 %v1784
        %v1932 = vunpack.c.l.b16 %v1785
        %v1933 = vunpack.c.l.b16 %v1786
        %v1934 = vunpack.c.l.b16 %v1787
        %v1935 = vunpack.c.l.b16 %v1788
        %v1936 = vunpack.c.l.b16 %v1789
        %v1937 = vunpack.c.l.b16 %v1790
        %v1938 = vunpack.c.l.b16 %v1791
        %v1939 = vunpack.c.l.b16 %v1792
        %v1940 = vunpack.c.l.b16 %v1793
        %v1941 = vunpack.c.l.b16 %v1794
        %v1942 = vunpack.c.l.b16 %v1795
        %v1943 = vunpack.c.l.b16 %v1796
        %v1944 = vunpack.c.l.b16 %v1797
        %v1945 = vunpack.c.l.b16 %v1798
        %v1946 = vunpack.c.l.b16 %v1799
        %v1947 = vunpack.c.l.b16 %v1800
        %v1948 = vunpack.c.l.b16 %v1801
        %v1949 = vunpack.c.l.b16 %v1802
        %v1950 = vunpack.c.l.b16 %v1803
        %v1951 = vunpack.c.l.b16 %v1804
        %v1952 = vunpack.c.l.b16 %v1805
        %v1953 = vunpack.c.l.b16 %v1806
        %v1954 = vunpack.c.l.b16 %v1807
        %v1955 = vpack.c.b16 %v1908, %v1907
        %v1956 = vpack.c.b16 %v1910, %v1909
        %v1957 = vpack.c.b16 %v1912, %v1911
        %v1958 = vpack.c.b16 %v1914, %v1913
        %v1959 = vpack.c.b16 %v1916, %v1915
        %v1960 = vpack.c.b16 %v1918, %v1917
        %v1961 = vpack.c.b16 %v1920, %v1919
        %v1962 = vpack.c.b16 %v1922, %v1921
        %v1963 = vpack.c.b16 %v1924, %v1923
        %v1964 = vpack.c.b16 %v1926, %v1925
        %v1965 = vpack.c.b16 %v1928, %v1927
        %v1966 = vpack.c.b16 %v1930, %v1929
        %v1967 = vpack.c.b16 %v1932, %v1931
        %v1968 = vpack.c.b16 %v1934, %v1933
        %v1969 = vpack.c.b16 %v1936, %v1935
        %v1970 = vpack.c.b16 %v1938, %v1937
        %v1971 = vpack.c.b16 %v1940, %v1939
        %v1972 = vpack.c.b16 %v1942, %v1941
        %v1973 = vpack.c.b16 %v1944, %v1943
        %v1974 = vpack.c.b16 %v1946, %v1945
        %v1975 = vpack.c.b16 %v1948, %v1947
        %v1976 = vpack.c.b16 %v1950, %v1949
        %v1977 = vpack.c.b16 %v1952, %v1951
        %v1978 = vpack.c.b16 %v1954, %v1953
        %2003 = vmatpush.bf16.msra.mxu0 %v1962
        %2004 = vmatpush.bf16.msra.mxu0 %v1961
        %2005 = vmatpush.bf16.msra.mxu0 %v1960
        %2006 = vmatpush.bf16.msra.mxu0 %v1959
        %2007 = vmatpush.bf16.msra.mxu0 %v1958
        %2008 = vmatpush.bf16.msra.mxu0 %v1957
        %2009 = vmatpush.bf16.msra.mxu0 %v1956
        %2010 = vmatpush.bf16.msra.mxu0 %v1955
        %2011 = vmatmul.bf16.gmra.mxu0 %v1841
        %v2012 = vpop.f32.mrf.mxu0
        %v2013 = vadd.f32 %v1810, %v2012
        %v2014 = vpop.f32.mrf.mxu0
        %v2015 = vadd.f32 %v1810, %v2014
        %2016 = vmatmul.bf16.gmra.mxu0 %v1844
        %v2017 = vpop.f32.mrf.mxu0
        %v2018 = vadd.f32 %v1810, %v2017
        %v2019 = vpop.f32.mrf.mxu0
        %v2020 = vadd.f32 %v1810, %v2019
        %2021 = vmatmul.bf16.gmra.mxu0 %v1847
        %v2022 = vpop.f32.mrf.mxu0
        %v2023 = vadd.f32 %v1810, %v2022
        %v2024 = vpop.f32.mrf.mxu0
        %v2025 = vadd.f32 %v1810, %v2024
        %2026 = vdwg.mxu0
        %2027 = vmatpush.bf16.msra.mxu0 %v1970
        %2028 = vmatpush.bf16.msra.mxu0 %v1969
        %2029 = vmatpush.bf16.msra.mxu0 %v1968
        %2030 = vmatpush.bf16.msra.mxu0 %v1967
        %2031 = vmatpush.bf16.msra.mxu0 %v1966
        %2032 = vmatpush.bf16.msra.mxu0 %v1965
        %2033 = vmatpush.bf16.msra.mxu0 %v1964
        %2034 = vmatpush.bf16.msra.mxu0 %v1963
        %2035 = vmatmul.bf16.gmra.mxu0 %v1842
        %v2036 = vpop.f32.mrf.mxu0
        %v2037 = vadd.f32 %v2013, %v2036
        %v2038 = vpop.f32.mrf.mxu0
        %v2039 = vadd.f32 %v2015, %v2038
        %2040 = vmatmul.bf16.gmra.mxu0 %v1845
        %v2041 = vpop.f32.mrf.mxu0
        %v2042 = vadd.f32 %v2018, %v2041
        %v2043 = vpop.f32.mrf.mxu0
        %v2044 = vadd.f32 %v2020, %v2043
        %2045 = vmatmul.bf16.gmra.mxu0 %v1848
        %v2046 = vpop.f32.mrf.mxu0
        %v2047 = vadd.f32 %v2023, %v2046
        %v2048 = vpop.f32.mrf.mxu0
        %v2049 = vadd.f32 %v2025, %v2048
        %2050 = vdwg.mxu0
        %2051 = vmatpush.bf16.msra.mxu0 %v1978
        %2052 = vmatpush.bf16.msra.mxu0 %v1977
        %2053 = vmatpush.bf16.msra.mxu0 %v1976
        %2054 = vmatpush.bf16.msra.mxu0 %v1975
        %2055 = vmatpush.bf16.msra.mxu0 %v1974
        %2056 = vmatpush.bf16.msra.mxu0 %v1973
        %2057 = vmatpush.bf16.msra.mxu0 %v1972
        %2058 = vmatpush.bf16.msra.mxu0 %v1971
        %2059 = vmatmul.bf16.gmra.mxu0 %v1843
        %v2060 = vpop.f32.mrf.mxu0
        %v2061 = vadd.f32 %v2037, %v2060
        %v2062 = vpop.f32.mrf.mxu0
        %v2063 = vadd.f32 %v2039, %v2062
        %2064 = vmatmul.bf16.gmra.mxu0 %v1846
        %v2065 = vpop.f32.mrf.mxu0
        %v2066 = vadd.f32 %v2042, %v2065
        %v2067 = vpop.f32.mrf.mxu0
        %v2068 = vadd.f32 %v2044, %v2067
        %2069 = vmatmul.bf16.gmra.mxu0 %v1849
        %v2070 = vpop.f32.mrf.mxu0
        %v2071 = vadd.f32 %v2047, %v2070
        %v2072 = vpop.f32.mrf.mxu0
        %v2073 = vadd.f32 %v2049, %v2072
        %2074 = vdwg.mxu0
        %v2075 = vmul.f32 %v2061, 0.2
        %v2076 = vmul.f32 %v2063, 0.2
        %v2077 = vmul.f32 %v2066, 0.2
        %v2078 = vmul.f32 %v2068, 0.2
        %v2079 = vmul.f32 %v2071, 0.2
        %v2080 = vmul.f32 %v2073, 0.2
        %v2081 = vmax.f32 %v2061, %v2075
        %v2082 = vmax.f32 %v2063, %v2076
        %v2083 = vmax.f32 %v2066, %v2077
        %v2084 = vmax.f32 %v2068, %v2078
        %v2085 = vmax.f32 %v2071, %v2079
        %v2086 = vmax.f32 %v2073, %v2080
        %v2087 = vpack.c.bf16 %v2081, %v2081
        %v2088 = vpack.c.bf16 %v2082, %v2082
        %v2089 = vpack.c.bf16 %v2083, %v2083
        %v2090 = vpack.c.bf16 %v2084, %v2084
        %v2091 = vpack.c.bf16 %v2085, %v2085
        %v2092 = vpack.c.bf16 %v2086, %v2086
        %2093 = vst [vmem:[#allocation5] sm:$0xf] %v2087
        %2094 = vst [vmem:[#allocation5 + $0xc] sm:$0xf] %v2088
        %2095 = vst [vmem:[#allocation5 + $0x18] sm:$0xf] %v2089
        %2096 = vst [vmem:[#allocation5 + $0x24] sm:$0xf] %v2090
        %2097 = vst [vmem:[#allocation5 + $0x30] sm:$0xf] %v2091
        %2098 = vst [vmem:[#allocation5 + $0x3c] sm:$0xf] %v2092
        %v2099 = vpack.c.bf16 %v1581, %v1581
        %v2100 = vpack.c.bf16 %v1583, %v1583
        %v2101 = vpack.c.bf16 %v1586, %v1586
        %v2102 = vpack.c.bf16 %v1588, %v1588
        %v2103 = vpack.c.bf16 %v1591, %v1591
        %v2104 = vpack.c.bf16 %v1593, %v1593
        %2105 = vst [vmem:[#allocation5 + $0x4] sm:$0xf] %v2099
        %2106 = vst [vmem:[#allocation5 + $0x10] sm:$0xf] %v2100
        %2107 = vst [vmem:[#allocation5 + $0x1c] sm:$0xf] %v2101
        %2108 = vst [vmem:[#allocation5 + $0x28] sm:$0xf] %v2102
        %2109 = vst [vmem:[#allocation5 + $0x34] sm:$0xf] %v2103
        %2110 = vst [vmem:[#allocation5 + $0x40] sm:$0xf] %v2104
        %v2111 = vld [vmem:[#allocation5] sm:$0xff]
        %v2112 = vld [vmem:[#allocation5 + $0xc] sm:$0xff]
        %v2113 = vld [vmem:[#allocation5 + $0x18] sm:$0xff]
        %v2114 = vld [vmem:[#allocation5 + $0x24] sm:$0xff]
        %v2115 = vld [vmem:[#allocation5 + $0x30] sm:$0xff]
        %v2116 = vld [vmem:[#allocation5 + $0x3c] sm:$0xff]
        %v2117 = vld [vmem:[%s1759 + $0xc0] sm:$0xf]
        %v2118 = vld [vmem:[%s1759 + $0xc4] sm:$0xf]
        %v2119 = vld [vmem:[%s1759 + $0xc8] sm:$0xf]
        %v2120 = vld [vmem:[%s1759 + $0xcc] sm:$0xf]
        %v2121 = vld [vmem:[%s1759 + $0xd0] sm:$0xf]
        %v2122 = vld [vmem:[%s1759 + $0xd4] sm:$0xf]
        %v2123 = vld [vmem:[%s1759 + $0xd8] sm:$0xf]
        %v2124 = vld [vmem:[%s1759 + $0xdc] sm:$0xf]
        %v2125 = vld [vmem:[%s1759 + $0xe0] sm:$0xf]
        %v2126 = vld [vmem:[%s1759 + $0xe4] sm:$0xf]
        %v2127 = vld [vmem:[%s1759 + $0xe8] sm:$0xf]
        %v2128 = vld [vmem:[%s1759 + $0xec] sm:$0xf]
        %v2129 = vld [vmem:[%s1759 + $0xf0] sm:$0xf]
        %v2130 = vld [vmem:[%s1759 + $0xf4] sm:$0xf]
        %v2131 = vld [vmem:[%s1759 + $0xf8] sm:$0xf]
        %v2132 = vld [vmem:[%s1759 + $0xfc] sm:$0xf]
        %v2133 = vld [vmem:[%s1759 + $0x100] sm:$0xf]
        %v2134 = vld [vmem:[%s1759 + $0x104] sm:$0xf]
        %v2135 = vld [vmem:[%s1759 + $0x108] sm:$0xf]
        %v2136 = vld [vmem:[%s1759 + $0x10c] sm:$0xf]
        %v2137 = vld [vmem:[%s1759 + $0x110] sm:$0xf]
        %v2138 = vld [vmem:[%s1759 + $0x114] sm:$0xf]
        %v2139 = vld [vmem:[%s1759 + $0x118] sm:$0xf]
        %v2140 = vld [vmem:[%s1759 + $0x11c] sm:$0xf]
        %v2141 = vld [vmem:[%s1759 + $0x120] sm:$0xf]
        %v2142 = vld [vmem:[%s1759 + $0x124] sm:$0xf]
        %v2143 = vld [vmem:[%s1759 + $0x128] sm:$0xf]
        %v2144 = vld [vmem:[%s1759 + $0x12c] sm:$0xf]
        %v2145 = vld [vmem:[%s1759 + $0x130] sm:$0xf]
        %v2146 = vld [vmem:[%s1759 + $0x134] sm:$0xf]
        %v2147 = vld [vmem:[%s1759 + $0x138] sm:$0xf]
        %v2148 = vld [vmem:[%s1759 + $0x13c] sm:$0xf]
        %v2149 = vld [vmem:[%s1808 + $0x1] sm:$0x1]
        %v2150 = vperm.slane %v2149, 0
        %v2157 = vunpack.c.l.b16 %v2111
        %v2158 = vunpack.c.h.b16 %v2111
        %v2159 = vunpack.c.l.b16 %v2112
        %v2160 = vunpack.c.h.b16 %v2112
        %v2161 = vunpack.c.l.b16 %v2113
        %v2162 = vunpack.c.h.b16 %v2113
        %v2163 = vunpack.c.l.b16 %v2114
        %v2164 = vunpack.c.h.b16 %v2114
        %v2165 = vunpack.c.l.b16 %v2115
        %v2166 = vunpack.c.h.b16 %v2115
        %v2167 = vunpack.c.l.b16 %v2116
        %v2168 = vunpack.c.h.b16 %v2116
        %v2169 = vpack.c.b16 %v2159, %v2157
        %v2170 = vpack.c.b16 %v2160, %v2158
        %v2171 = vpack.c.b16 %v2163, %v2161
        %v2172 = vpack.c.b16 %v2164, %v2162
        %v2173 = vpack.c.b16 %v2167, %v2165
        %v2174 = vpack.c.b16 %v2168, %v2166
        %v2213 = vunpack.c.l.b16 %v2117
        %v2214 = vunpack.c.l.b16 %v2118
        %v2215 = vunpack.c.l.b16 %v2119
        %v2216 = vunpack.c.l.b16 %v2120
        %v2217 = vunpack.c.l.b16 %v2121
        %v2218 = vunpack.c.l.b16 %v2122
        %v2219 = vunpack.c.l.b16 %v2123
        %v2220 = vunpack.c.l.b16 %v2124
        %v2221 = vunpack.c.l.b16 %v2125
        %v2222 = vunpack.c.l.b16 %v2126
        %v2223 = vunpack.c.l.b16 %v2127
        %v2224 = vunpack.c.l.b16 %v2128
        %v2225 = vunpack.c.l.b16 %v2129
        %v2226 = vunpack.c.l.b16 %v2130
        %v2227 = vunpack.c.l.b16 %v2131
        %v2228 = vunpack.c.l.b16 %v2132
        %v2229 = vunpack.c.l.b16 %v2133
        %v2230 = vunpack.c.l.b16 %v2134
        %v2231 = vunpack.c.l.b16 %v2135
        %v2232 = vunpack.c.l.b16 %v2136
        %v2233 = vunpack.c.l.b16 %v2137
        %v2234 = vunpack.c.l.b16 %v2138
        %v2235 = vunpack.c.l.b16 %v2139
        %v2236 = vunpack.c.l.b16 %v2140
        %v2237 = vunpack.c.l.b16 %v2141
        %v2238 = vunpack.c.l.b16 %v2142
        %v2239 = vunpack.c.l.b16 %v2143
        %v2240 = vunpack.c.l.b16 %v2144
        %v2241 = vunpack.c.l.b16 %v2145
        %v2242 = vunpack.c.l.b16 %v2146
        %v2243 = vunpack.c.l.b16 %v2147
        %v2244 = vunpack.c.l.b16 %v2148
        %v2245 = vpack.c.b16 %v2214, %v2213
        %v2246 = vpack.c.b16 %v2216, %v2215
        %v2247 = vpack.c.b16 %v2218, %v2217
        %v2248 = vpack.c.b16 %v2220, %v2219
        %v2249 = vpack.c.b16 %v2222, %v2221
        %v2250 = vpack.c.b16 %v2224, %v2223
        %v2251 = vpack.c.b16 %v2226, %v2225
        %v2252 = vpack.c.b16 %v2228, %v2227
        %v2253 = vpack.c.b16 %v2230, %v2229
        %v2254 = vpack.c.b16 %v2232, %v2231
        %v2255 = vpack.c.b16 %v2234, %v2233
        %v2256 = vpack.c.b16 %v2236, %v2235
        %v2257 = vpack.c.b16 %v2238, %v2237
        %v2258 = vpack.c.b16 %v2240, %v2239
        %v2259 = vpack.c.b16 %v2242, %v2241
        %v2260 = vpack.c.b16 %v2244, %v2243
        %2277 = vmatpush.bf16.msra.mxu0 %v2252
        %2278 = vmatpush.bf16.msra.mxu0 %v2251
        %2279 = vmatpush.bf16.msra.mxu0 %v2250
        %2280 = vmatpush.bf16.msra.mxu0 %v2249
        %2281 = vmatpush.bf16.msra.mxu0 %v2248
        %2282 = vmatpush.bf16.msra.mxu0 %v2247
        %2283 = vmatpush.bf16.msra.mxu0 %v2246
        %2284 = vmatpush.bf16.msra.mxu0 %v2245
        %2285 = vmatmul.bf16.gmra.mxu0 %v2169
        %v2286 = vpop.f32.mrf.mxu0
        %v2287 = vpop.f32.mrf.mxu0
        %2288 = vmatmul.bf16.gmra.mxu0 %v2171
        %v2289 = vpop.f32.mrf.mxu0
        %v2290 = vadd.f32 %v2150, %v2289
        %v2291 = vpop.f32.mrf.mxu0
        %v2292 = vadd.f32 %v2150, %v2291
        %2293 = vmatmul.bf16.gmra.mxu0 %v2173
        %v2294 = vpop.f32.mrf.mxu0
        %v2295 = vpop.f32.mrf.mxu0
        %2296 = vdwg.mxu0
        %2297 = vmatpush.bf16.msra.mxu0 %v2260
        %2298 = vmatpush.bf16.msra.mxu0 %v2259
        %2299 = vmatpush.bf16.msra.mxu0 %v2258
        %2300 = vmatpush.bf16.msra.mxu0 %v2257
        %2301 = vmatpush.bf16.msra.mxu0 %v2256
        %2302 = vmatpush.bf16.msra.mxu0 %v2255
        %2303 = vmatpush.bf16.msra.mxu0 %v2254
        %2304 = vmatpush.bf16.msra.mxu0 %v2253
        %2305 = vmatmul.bf16.gmra.mxu0 %v2170
        %v2306 = vpop.f32.mrf.mxu0
        %v2307 = vpop.f32.mrf.mxu0
        %2308 = vmatmul.bf16.gmra.mxu0 %v2172
        %v2309 = vpop.f32.mrf.mxu0
        %v2310 = vadd.f32 %v2290, %v2309
        %v2311 = vpop.f32.mrf.mxu0
        %v2312 = vadd.f32 %v2292, %v2311
        %2313 = vmatmul.bf16.gmra.mxu0 %v2174
        %v2314 = vpop.f32.mrf.mxu0
        %v2315 = vpop.f32.mrf.mxu0
        %2316 = vdwg.mxu0
        %2317 = vst [vmem:[%s170] sm:$0xff] %v2310
        %2318 = vst [vmem:[%s170 + $0x8] sm:$0xff] %v2312
        %s2319 = sand.u32 %s83, 1
        %s2320 = scalar_lea.sflag [#allocation9], %s2319
        %s2321 = sand.u32 %s83, 1
        %s2322 = smul.addr %s2321, 16
        %s2323 = scalar_lea.vmem [#allocation12], %s2322
        // Predicated region
        $region41: #{tpu_custom_call.1} parent=27 // pred_check
          %p2324 = pneg %p93
        $region42: #{tpu_custom_call.1} parent=27 // pred_check_branch
          %2326 = sbr.rel (%p2324) target = $region44
        $region43: #{tpu_custom_call.1} parent=27 // pred_region
          %s2327 = smul.u32 2, %s24
          %2329 = vsyncadd %s2320, 0
          %s2330 = smul.addr %s23, 6
          %s2331 = sadd.s32 %s2327, %s2330
          %s2332 = smul.addr %s2331, 8
          %s2333 = scalar_lea.hbm %s3, %s2332
          %s2334 = sshll.u32 %s2323, 4
          %s2335 = int_to_ptr.vmem [resolvable:$true] %s2334
          %s2336 = sshll.u32 %s2333, 4
          %s2337 = int_to_ptr.hbm [resolvable:$true] %s2336
          %2342 = dma.vmem_to_hbm [thread:$0]  %s2335, 256, %s2337, %s2320, 128, 128, 8
        $region44: #{tpu_custom_call.1} parent=27 // pred_fallthru
          _
      $region28: #{tpu_custom_call.1} parent=5 // pred_fallthru
        _
      %p2343 = scmp.le.s32.totalorder 2, %s14
      // Predicated region
      $region45: #{tpu_custom_call.1} parent=5 // pred_check
        %p2344 = pneg %p2343
      $region46: #{tpu_custom_call.1} parent=5 // pred_check_branch
        %2346 = sbr.rel (%p2344) target = $region48
      $region47: #{tpu_custom_call.1} parent=5 // pred_region
        %s2347 = ssub.s32 %s14, 2
        // Predicated region
        $region49: #{tpu_custom_call.1} parent=47 // pred_check
          %p2348 = pneg %p99
        $region50: #{tpu_custom_call.1} parent=47 // pred_check_branch
          %2350 = sbr.rel (%p2348) target = $region52
        $region51: #{tpu_custom_call.1} parent=47 // pred_region
          %s2351 = sand.u32 %s84, 1
          %s2352 = scalar_lea.sflag [#allocation9], %s2351
          %s2353 = sand.u32 %s84, 1
          %s2354 = smul.addr %s2353, 16
          %s2355 = scalar_lea.vmem [#allocation12], %s2354
          %2357 = dma.done %s2352, 256
        $region52: #{tpu_custom_call.1} parent=47 // pred_fallthru
          _
      $region48: #{tpu_custom_call.1} parent=5 // pred_fallthru
        _
    $region6: #{tpu_custom_call.1} parent=1 // loop_footer
      %s18 = sadd.s32 1, %s14
    $region7: #{tpu_custom_call.1} parent=1 // loop_footer_branch
      %13 = sbr.rel target = $region3
    $region8: #{tpu_custom_call.1} parent=1 // loop_exit
      _
    %2358 = vsyncpa [#allocation8], 1
    %s2359 = scalar_lea.sflag [#allocation8], 1
    %2360 = vsyncpa %s2359, 1
    %2361 = vsyncpa [#allocation11], 1
    %2362 = vsyncpa [#allocation9], 1
    %s2363 = scalar_lea.sflag [#allocation9], 1
    %2364 = vsyncpa %s2363, 1
  %2365 = vsyncmov [#allocation6]
  %s2366 = vpop.sfrf %2365
  %p2367 = scmp.eq.s32.totalorder %s2366, 0
  %p2368 = pneg %p2367
  %2370 = shalt.err (%p2368)

</llo_original>
